<compile_context>
chip_gen: v7x
topology: tpu7x:2x2x1
jax: 0.10.0
libtpu: 0.0.40
codegen_flags: <defaults>
</compile_context>

<pallas_src>
import math

import jax
import jax.numpy as jnp
import numpy as np
from jax.experimental import pallas as pl
from jax.experimental.pallas import tpu as pltpu  # noqa: F401  (TPU backend assumed)

# ---------------- small-scale BART-like config (synthetic) -----------------
VOCAB = 64
MAX_POS = 32
D_MODEL = 32
N_HEADS = 4
HEAD_DIM = D_MODEL // N_HEADS
FFN_DIM = 64
N_LAYERS = 2
MEM_SIZE = 10
LN_EPS = 1e-5
NEG_BIAS = -1e9  # additive mask value for masked keys (HF uses finfo.min; same softmax result)

VEC_ROWS = 2 + 9 * N_LAYERS  # packed (rows, D) slab: emb-LN g/b + 9 vectors per layer


def _layer_norm(x, g, b):
    mu = jnp.mean(x, axis=-1, keepdims=True)
    var = jnp.mean(jnp.square(x - mu), axis=-1, keepdims=True)
    return (x - mu) * jax.lax.rsqrt(var + LN_EPS) * g + b


def encoder_kernel(x_ref, bias_ref, hmask_ref,
                   w_attn_ref, w_fc1_ref, w_fc2_ref,
                   vec_ref, b1_ref,
                   mem_w_ref, mem_b_ref, memory_ref,
                   out_ref):
    B, S = bias_ref.shape          # (B, S) additive key bias
    D = x_ref.shape[1]
    H = N_HEADS
    scale = 1.0 / math.sqrt(HEAD_DIM)
    bf16 = jnp.bfloat16
    f32 = jnp.float32

    def vrow(i):                   # (1, D) f32 row of the packed vector slab
        return vec_ref[i:i + 1, :]

    x = x_ref[...]                 # (B*S, D) f32 fused activations
    hmask = hmask_ref[...]         # (H*S, D) f32: 1 where column d belongs to head r//S

    # BART: layernorm_embedding right after token + positional embedding
    x = _layer_norm(x, vrow(0), vrow(1))

    for l in range(N_LAYERS):
        base = 2 + 9 * l
        # ----- self-attention block (post-LN, BART style) -----
        residual = x
        xb = x.astype(bf16)
        q = jnp.dot(xb, w_attn_ref[4 * l + 0], preferred_element_type=f32) + vrow(base + 0)
        k = jnp.dot(xb, w_attn_ref[4 * l + 1], preferred_element_type=f32) + vrow(base + 1)
        v = jnp.dot(xb, w_attn_ref[4 * l + 2], preferred_element_type=f32) + vrow(base + 2)
        q = q * scale

        ctx_parts = []
        for b in range(B):                       # tiny static loop over sequences
            rs = slice(b * S, (b + 1) * S)
            qb, kb, vb = q[rs], k[rs], v[rs]     # sublane-aligned (S, D) slices
            # Replicate queries per head along sublanes, zero out other heads' columns:
            # scores[h*S+s, t] = sum_{d in head h} q[s,d] * k[t,d]
            q_exp = (jnp.concatenate([qb] * H, axis=0) * hmask).astype(bf16)   # (H*S, D)
            scores = jax.lax.dot_general(
                q_exp, kb.astype(bf16),
                dimension_numbers=(((1,), (1,)), ((), ())),
                preferred_element_type=f32)                                    # (H*S, S)
            scores = scores + bias_ref[b:b + 1, :]
            scores = scores - jnp.max(scores, axis=-1, keepdims=True)
            p = jnp.exp(scores)
            p = p * pl.reciprocal(jnp.sum(p, axis=-1, keepdims=True), approx=True)
            ctx_full = jnp.dot(p.astype(bf16), vb.astype(bf16),
                               preferred_element_type=f32)                     # (H*S, D)
            ctx_full = ctx_full * hmask          # keep only each head's own columns
            ctx_b = ctx_full[0:S]
            for h in range(1, H):
                ctx_b = ctx_b + ctx_full[h * S:(h + 1) * S]                    # (S, D)
            ctx_parts.append(ctx_b)
        ctx = jnp.concatenate(ctx_parts, axis=0)                               # (B*S, D)

        attn = jnp.dot(ctx.astype(bf16), w_attn_ref[4 * l + 3],
                       preferred_element_type=f32) + vrow(base + 3)
        x = _layer_norm(residual + attn, vrow(base + 4), vrow(base + 5))

        # ----- feed-forward block -----
        residual = x
        h1 = jnp.dot(x.astype(bf16), w_fc1_ref[l],
                     preferred_element_type=f32) + b1_ref[l:l + 1, :]
        # TODO(synk): HF BART uses exact erf-GELU; tanh approximation used for Mosaic lowering safety.
        h1 = jax.nn.gelu(h1, approximate=True)
        h2 = jnp.dot(h1.astype(bf16), w_fc2_ref[l],
                     preferred_element_type=f32) + vrow(base + 6)
        x = _layer_norm(residual + h2, vrow(base + 7), vrow(base + 8))

    # ----- MemoryModule on the last token of each sequence (f32, tiny) -----
    last = jnp.concatenate([x[(b + 1) * S - 1:(b + 1) * S, :] for b in range(B)], axis=0)  # (B, D)
    logits = jnp.dot(last, mem_w_ref[...], preferred_element_type=f32) + mem_b_ref[...]
    logits = logits - jnp.max(logits, axis=-1, keepdims=True)
    pm = jnp.exp(logits)
    pm = pm * pl.reciprocal(jnp.sum(pm, axis=-1, keepdims=True), approx=True)
    mem_out = jnp.dot(pm, memory_ref[...], preferred_element_type=f32)                     # (B, D)

    # hidden_states[:, -1, :] = memory_output  -> full store, then overwrite last rows
    out_ref[...] = x
    for b in range(B):
        out_ref[(b + 1) * S - 1:(b + 1) * S, :] = mem_out[b:b + 1, :]


def modified_encoder(input_ids, attention_mask, p):
    B, S = input_ids.shape
    L, D, F, M, H = N_LAYERS, D_MODEL, FFN_DIM, MEM_SIZE, N_HEADS
    bf16 = jnp.bfloat16

    # glue (plain JAX): embedding gathers + BART learned positional offset (+2)
    tok = p["embed_tokens"][input_ids]                       # (B, S, D)
    pos = p["embed_positions"][jnp.arange(S) + 2]            # (S, D)
    x2d = (tok + pos[None, :, :]).astype(jnp.float32).reshape(B * S, D)

    # additive key-mask bias (0 where attended, NEG_BIAS where masked), one row per sequence
    attn_bias = ((1.0 - attention_mask.astype(jnp.float32)) * NEG_BIAS)        # (B, S)

    # per-head column mask for the fused attention trick: row r belongs to head r//S
    head_mask = ((jnp.arange(D)[None, :] // HEAD_DIM) ==
                 (jnp.arange(H * S)[:, None] // S)).astype(jnp.float32)        # (H*S, D)

    # ---- pack parameters into a few slabs (fewer DMAs / BlockSpecs) ----
    w_attn = jnp.stack([p["wq"], p["wk"], p["wv"], p["wo"]], axis=1)           # (L, 4, D, D)
    w_attn = w_attn.reshape(L * 4, D, D).astype(bf16)
    w_fc1 = p["w1"].astype(bf16)                                               # (L, D, F)
    w_fc2 = p["w2"].astype(bf16)                                               # (L, F, D)
    b1s = p["b1"].reshape(L, F).astype(jnp.float32)                            # (L, F)

    vec_rows = [p["ln_emb_g"], p["ln_emb_b"]]
    for l in range(L):
        vec_rows += [p["bq"][l], p["bk"][l], p["bv"][l], p["bo"][l],
                     p["ln1_g"][l], p["ln1_b"][l], p["b2"][l],
                     p["ln2_g"][l], p["ln2_b"][l]]
    vec32 = jnp.concatenate(vec_rows, axis=0).astype(jnp.float32)              # (VEC_ROWS, D)

    out2d = pl.pallas_call(
        encoder_kernel,
        out_shape=jax.ShapeDtypeStruct((B * S, D), jnp.float32),
    )(x2d, attn_bias, head_mask,
      w_attn, w_fc1, w_fc2,
      vec32, b1s,
      p["mem_w"], p["mem_b"], p["memory"])

    return out2d.reshape(B, S, D)


def init_params(key):
    keys = iter(jax.random.split(key, 48))
    nrm = lambda shape, s=0.02: (s * jax.random.normal(next(keys), shape)).astype(jnp.float32)
    L, D, F, M = N_LAYERS, D_MODEL, FFN_DIM, MEM_SIZE
    return {
        "embed_tokens": nrm((VOCAB, D)),
        "embed_positions": nrm((MAX_POS + 2, D)),
        "ln_emb_g": jnp.ones((1, D), jnp.float32), "ln_emb_b": jnp.zeros((1, D), jnp.float32),
        "wq": nrm((L, D, D)), "bq": nrm((L, 1, D)),
        "wk": nrm((L, D, D)), "bk": nrm((L, 1, D)),
        "wv": nrm((L, D, D)), "bv": nrm((L, 1, D)),
        "wo": nrm((L, D, D)), "bo": nrm((L, 1, D)),
        "ln1_g": jnp.ones((L, 1, D), jnp.float32), "ln1_b": jnp.zeros((L, 1, D), jnp.float32),
        "w1": nrm((L, D, F)), "b1": nrm((L, 1, F)),
        "w2": nrm((L, F, D)), "b2": nrm((L, 1, D)),
        "ln2_g": jnp.ones((L, 1, D), jnp.float32), "ln2_b": jnp.zeros((L, 1, D), jnp.float32),
        "mem_w": nrm((D, M), 0.1), "mem_b": nrm((1, M), 0.1),
        "memory": jax.random.normal(next(keys), (M, D)).astype(jnp.float32),  # torch.randn analog
    }


def reference(input_ids, attention_mask, p):
    """Pure-JAX f32 reference of the same forward pass."""
    B, S = input_ids.shape
    D, H, HD = D_MODEL, N_HEADS, HEAD_DIM
    x = p["embed_tokens"][input_ids] + p["embed_positions"][jnp.arange(S) + 2][None]
    bias = ((1.0 - attention_mask.astype(jnp.float32)) * NEG_BIAS)[:, None, None, :]

    x = _layer_norm(x, p["ln_emb_g"], p["ln_emb_b"])
    for l in range(N_LAYERS):
        res = x
        q = (x @ p["wq"][l] + p["bq"][l]) * (HD ** -0.5)
        k = x @ p["wk"][l] + p["bk"][l]
        v = x @ p["wv"][l] + p["bv"][l]
        qh = q.reshape(B, S, H, HD).transpose(0, 2, 1, 3)
        kh = k.reshape(B, S, H, HD).transpose(0, 2, 1, 3)
        vh = v.reshape(B, S, H, HD).transpose(0, 2, 1, 3)
        sc = qh @ kh.transpose(0, 1, 3, 2) + bias
        pr = jax.nn.softmax(sc, axis=-1)
        ctx = (pr @ vh).transpose(0, 2, 1, 3).reshape(B, S, D)
        attn = ctx @ p["wo"][l] + p["bo"][l]
        x = _layer_norm(res + attn, p["ln1_g"][l], p["ln1_b"][l])
        res = x
        h = jax.nn.gelu(x @ p["w1"][l] + p["b1"][l], approximate=True)
        h = h @ p["w2"][l] + p["b2"][l]
        x = _layer_norm(res + h, p["ln2_g"][l], p["ln2_b"][l])
    last = x[:, -1, :]
    probs = jax.nn.softmax(last @ p["mem_w"] + p["mem_b"], axis=-1)
    mem_out = probs @ p["memory"]
    return x.at[:, -1, :].set(mem_out)


if __name__ == "__main__":
    key = jax.random.PRNGKey(0)
    pkey, ikey = jax.random.split(key)
    params = init_params(pkey)

    B, S = 2, 8
    input_ids = jax.random.randint(ikey, (B, S), 0, VOCAB, dtype=jnp.int32)
    attention_mask = jnp.ones((B, S), dtype=jnp.int32).at[1, 2].set(0)  # one masked position

    out = modified_encoder(input_ids, attention_mask, params)
    out = jax.block_until_ready(out)

    ref = reference(input_ids, attention_mask, params)
    # bf16 matmul operands (f32 accumulation) + approx reciprocal vs. pure-f32 reference:
    # tolerance relaxed from 1e-3 to 2e-2 per the performance review's precision budget.
    np.testing.assert_allclose(np.asarray(out), np.asarray(ref), rtol=2e-2, atol=2e-2)
    print("KERNEL_OK")
</pallas_src>

<mosaic_0001>
module attributes {stable_mosaic.version = 11 : i64} {
  func.func @encoder_kernel(%arg0: memref<16x32xf32, #tpu.memory_space<vmem>>, %arg1: memref<2x8xf32, #tpu.memory_space<vmem>>, %arg2: memref<32x32xf32, #tpu.memory_space<vmem>>, %arg3: memref<8x32x32xbf16, #tpu.memory_space<vmem>>, %arg4: memref<2x32x64xbf16, #tpu.memory_space<vmem>>, %arg5: memref<2x64x32xbf16, #tpu.memory_space<vmem>>, %arg6: memref<20x32xf32, #tpu.memory_space<vmem>>, %arg7: memref<2x64xf32, #tpu.memory_space<vmem>>, %arg8: memref<32x10xf32, #tpu.memory_space<vmem>>, %arg9: memref<1x10xf32, #tpu.memory_space<vmem>>, %arg10: memref<10x32xf32, #tpu.memory_space<vmem>>, %arg11: memref<16x32xf32, #tpu.memory_space<vmem>>) attributes {dimension_semantics = [], scalar_prefetch = 0 : i64, scratch_operands = 0 : i64, tpu.core_type = #tpu.core_type<tc>} {
    %c0 = arith.constant 0 : index
    %c0_0 = arith.constant 0 : index
    %0 = vector.load %arg0[%c0, %c0_0] : memref<16x32xf32, #tpu.memory_space<vmem>>, vector<16x32xf32>
    %c0_1 = arith.constant 0 : index
    %c0_2 = arith.constant 0 : index
    %1 = vector.load %arg2[%c0_1, %c0_2] : memref<32x32xf32, #tpu.memory_space<vmem>>, vector<32x32xf32>
    %c0_3 = arith.constant 0 : index
    %c0_4 = arith.constant 0 : index
    %2 = vector.load %arg6[%c0_3, %c0_4] : memref<20x32xf32, #tpu.memory_space<vmem>>, vector<1x32xf32>
    %c1 = arith.constant 1 : index
    %c0_5 = arith.constant 0 : index
    %3 = vector.load %arg6[%c1, %c0_5] : memref<20x32xf32, #tpu.memory_space<vmem>>, vector<1x32xf32>
    %cst = arith.constant dense<0.000000e+00> : vector<16xf32>
    %4 = vector.multi_reduction <add>, %0, %cst [1] : vector<16x32xf32> to vector<16xf32>
    %5 = vector.shape_cast %4 : vector<16xf32> to vector<16x1xf32>
    %cst_6 = arith.constant 3.200000e+01 : f32
    %6 = vector.broadcast %cst_6 : f32 to vector<16x1xf32>
    %7 = arith.divf %5, %6 : vector<16x1xf32>
    %8 = vector.broadcast %7 : vector<16x1xf32> to vector<16x32xf32>
    %9 = arith.subf %0, %8 : vector<16x32xf32>
    %10 = arith.mulf %9, %9 : vector<16x32xf32>
    %cst_7 = arith.constant dense<0.000000e+00> : vector<16xf32>
    %11 = vector.multi_reduction <add>, %10, %cst_7 [1] : vector<16x32xf32> to vector<16xf32>
    %12 = vector.shape_cast %11 : vector<16xf32> to vector<16x1xf32>
    %cst_8 = arith.constant 3.200000e+01 : f32
    %13 = vector.broadcast %cst_8 : f32 to vector<16x1xf32>
    %14 = arith.divf %12, %13 : vector<16x1xf32>
    %15 = vector.broadcast %7 : vector<16x1xf32> to vector<16x32xf32>
    %16 = arith.subf %0, %15 : vector<16x32xf32>
    %cst_9 = arith.constant 9.99999974E-6 : f32
    %17 = vector.broadcast %cst_9 : f32 to vector<16x1xf32>
    %18 = arith.addf %14, %17 : vector<16x1xf32>
    %19 = math.rsqrt %18 : vector<16x1xf32>
    %20 = vector.broadcast %19 : vector<16x1xf32> to vector<16x32xf32>
    %21 = arith.mulf %16, %20 : vector<16x32xf32>
    %22 = vector.broadcast %2 : vector<1x32xf32> to vector<16x32xf32>
    %23 = arith.mulf %21, %22 : vector<16x32xf32>
    %24 = vector.broadcast %3 : vector<1x32xf32> to vector<16x32xf32>
    %25 = arith.addf %23, %24 : vector<16x32xf32>
    %26 = arith.truncf %25 : vector<16x32xf32> to vector<16x32xbf16>
    %c0_10 = arith.constant 0 : index
    %c0_11 = arith.constant 0 : index
    %c0_12 = arith.constant 0 : index
    %27 = vector.load %arg3[%c0_10, %c0_11, %c0_12] : memref<8x32x32xbf16, #tpu.memory_space<vmem>>, vector<1x32x32xbf16>
    %28 = vector.shape_cast %27 : vector<1x32x32xbf16> to vector<32x32xbf16>
    %cst_13 = arith.constant dense<0.000000e+00> : vector<16x32xf32>
    %29 = tpu.matmul %26, %28, %cst_13 {dimension_numbers = #tpu.dot_dimension_numbers<[1], [0], [0], [1], [0, 0, 1, 1], [], []>} : vector<16x32xbf16>, vector<32x32xbf16>, vector<16x32xf32> -> vector<16x32xf32>
    %c2 = arith.constant 2 : index
    %c0_14 = arith.constant 0 : index
    %30 = vector.load %arg6[%c2, %c0_14] : memref<20x32xf32, #tpu.memory_space<vmem>>, vector<1x32xf32>
    %31 = vector.broadcast %30 : vector<1x32xf32> to vector<16x32xf32>
    %32 = arith.addf %29, %31 : vector<16x32xf32>
    %c1_15 = arith.constant 1 : index
    %c0_16 = arith.constant 0 : index
    %c0_17 = arith.constant 0 : index
    %33 = vector.load %arg3[%c1_15, %c0_16, %c0_17] : memref<8x32x32xbf16, #tpu.memory_space<vmem>>, vector<1x32x32xbf16>
    %34 = vector.shape_cast %33 : vector<1x32x32xbf16> to vector<32x32xbf16>
    %cst_18 = arith.constant dense<0.000000e+00> : vector<16x32xf32>
    %35 = tpu.matmul %26, %34, %cst_18 {dimension_numbers = #tpu.dot_dimension_numbers<[1], [0], [0], [1], [0, 0, 1, 1], [], []>} : vector<16x32xbf16>, vector<32x32xbf16>, vector<16x32xf32> -> vector<16x32xf32>
    %c3 = arith.constant 3 : index
    %c0_19 = arith.constant 0 : index
    %36 = vector.load %arg6[%c3, %c0_19] : memref<20x32xf32, #tpu.memory_space<vmem>>, vector<1x32xf32>
    %37 = vector.broadcast %36 : vector<1x32xf32> to vector<16x32xf32>
    %38 = arith.addf %35, %37 : vector<16x32xf32>
    %c2_20 = arith.constant 2 : index
    %c0_21 = arith.constant 0 : index
    %c0_22 = arith.constant 0 : index
    %39 = vector.load %arg3[%c2_20, %c0_21, %c0_22] : memref<8x32x32xbf16, #tpu.memory_space<vmem>>, vector<1x32x32xbf16>
    %40 = vector.shape_cast %39 : vector<1x32x32xbf16> to vector<32x32xbf16>
    %cst_23 = arith.constant dense<0.000000e+00> : vector<16x32xf32>
    %41 = tpu.matmul %26, %40, %cst_23 {dimension_numbers = #tpu.dot_dimension_numbers<[1], [0], [0], [1], [0, 0, 1, 1], [], []>} : vector<16x32xbf16>, vector<32x32xbf16>, vector<16x32xf32> -> vector<16x32xf32>
    %c4 = arith.constant 4 : index
    %c0_24 = arith.constant 0 : index
    %42 = vector.load %arg6[%c4, %c0_24] : memref<20x32xf32, #tpu.memory_space<vmem>>, vector<1x32xf32>
    %43 = vector.broadcast %42 : vector<1x32xf32> to vector<16x32xf32>
    %44 = arith.addf %41, %43 : vector<16x32xf32>
    %cst_25 = arith.constant 0.353553385 : f32
    %45 = vector.broadcast %cst_25 : f32 to vector<16x32xf32>
    %46 = arith.mulf %32, %45 : vector<16x32xf32>
    %47 = vector.extract_strided_slice %46 {offsets = [0, 0], sizes = [8, 32], strides = [1, 1]} : vector<16x32xf32> to vector<8x32xf32>
    %48 = vector.extract_strided_slice %38 {offsets = [0, 0], sizes = [8, 32], strides = [1, 1]} : vector<16x32xf32> to vector<8x32xf32>
    %49 = vector.extract_strided_slice %44 {offsets = [0, 0], sizes = [8, 32], strides = [1, 1]} : vector<16x32xf32> to vector<8x32xf32>
    %50 = tpu.concatenate %47, %47, %47, %47 in 0 : vector<8x32xf32>, vector<8x32xf32>, vector<8x32xf32>, vector<8x32xf32> -> vector<32x32xf32>
    %51 = arith.mulf %50, %1 : vector<32x32xf32>
    %52 = arith.truncf %51 : vector<32x32xf32> to vector<32x32xbf16>
    %53 = arith.truncf %48 : vector<8x32xf32> to vector<8x32xbf16>
    %cst_26 = arith.constant dense<0.000000e+00> : vector<32x8xf32>
    %54 = tpu.matmul %52, %53, %cst_26 {dimension_numbers = #tpu.dot_dimension_numbers<[1], [1], [0], [0], [0, 0, 1, 0], [], []>} : vector<32x32xbf16>, vector<8x32xbf16>, vector<32x8xf32> -> vector<32x8xf32>
    %c0_27 = arith.constant 0 : index
    %c0_28 = arith.constant 0 : index
    %55 = vector.load %arg1[%c0_27, %c0_28] : memref<2x8xf32, #tpu.memory_space<vmem>>, vector<1x8xf32>
    %56 = vector.broadcast %55 : vector<1x8xf32> to vector<32x8xf32>
    %57 = arith.addf %54, %56 : vector<32x8xf32>
    %cst_29 = arith.constant dense<0xFF800000> : vector<32xf32>
    %58 = vector.multi_reduction <maximumf>, %57, %cst_29 [1] : vector<32x8xf32> to vector<32xf32>
    %59 = vector.shape_cast %58 : vector<32xf32> to vector<32x1xf32>
    %60 = vector.broadcast %59 : vector<32x1xf32> to vector<32x8xf32>
    %61 = arith.subf %57, %60 : vector<32x8xf32>
    %62 = math.exp %61 : vector<32x8xf32>
    %cst_30 = arith.constant dense<0.000000e+00> : vector<32xf32>
    %63 = vector.multi_reduction <add>, %62, %cst_30 [1] : vector<32x8xf32> to vector<32xf32>
    %64 = vector.shape_cast %63 : vector<32xf32> to vector<32x1xf32>
    %65 = tpu.reciprocal %64 {approx = true} : vector<32x1xf32> -> vector<32x1xf32>
    %66 = vector.broadcast %65 : vector<32x1xf32> to vector<32x8xf32>
    %67 = arith.mulf %62, %66 : vector<32x8xf32>
    %68 = arith.truncf %67 : vector<32x8xf32> to vector<32x8xbf16>
    %69 = arith.truncf %49 : vector<8x32xf32> to vector<8x32xbf16>
    %cst_31 = arith.constant dense<0.000000e+00> : vector<32x32xf32>
    %70 = tpu.matmul %68, %69, %cst_31 {dimension_numbers = #tpu.dot_dimension_numbers<[1], [0], [0], [1], [0, 0, 1, 1], [], []>} : vector<32x8xbf16>, vector<8x32xbf16>, vector<32x32xf32> -> vector<32x32xf32>
    %71 = arith.mulf %70, %1 : vector<32x32xf32>
    %72 = vector.extract_strided_slice %71 {offsets = [0, 0], sizes = [8, 32], strides = [1, 1]} : vector<32x32xf32> to vector<8x32xf32>
    %73 = vector.extract_strided_slice %71 {offsets = [8, 0], sizes = [8, 32], strides = [1, 1]} : vector<32x32xf32> to vector<8x32xf32>
    %74 = arith.addf %72, %73 : vector<8x32xf32>
    %75 = vector.extract_strided_slice %71 {offsets = [16, 0], sizes = [8, 32], strides = [1, 1]} : vector<32x32xf32> to vector<8x32xf32>
    %76 = arith.addf %74, %75 : vector<8x32xf32>
    %77 = vector.extract_strided_slice %71 {offsets = [24, 0], sizes = [8, 32], strides = [1, 1]} : vector<32x32xf32> to vector<8x32xf32>
    %78 = arith.addf %76, %77 : vector<8x32xf32>
    %79 = vector.extract_strided_slice %46 {offsets = [8, 0], sizes = [8, 32], strides = [1, 1]} : vector<16x32xf32> to vector<8x32xf32>
    %80 = vector.extract_strided_slice %38 {offsets = [8, 0], sizes = [8, 32], strides = [1, 1]} : vector<16x32xf32> to vector<8x32xf32>
    %81 = vector.extract_strided_slice %44 {offsets = [8, 0], sizes = [8, 32], strides = [1, 1]} : vector<16x32xf32> to vector<8x32xf32>
    %82 = tpu.concatenate %79, %79, %79, %79 in 0 : vector<8x32xf32>, vector<8x32xf32>, vector<8x32xf32>, vector<8x32xf32> -> vector<32x32xf32>
    %83 = arith.mulf %82, %1 : vector<32x32xf32>
    %84 = arith.truncf %83 : vector<32x32xf32> to vector<32x32xbf16>
    %85 = arith.truncf %80 : vector<8x32xf32> to vector<8x32xbf16>
    %cst_32 = arith.constant dense<0.000000e+00> : vector<32x8xf32>
    %86 = tpu.matmul %84, %85, %cst_32 {dimension_numbers = #tpu.dot_dimension_numbers<[1], [1], [0], [0], [0, 0, 1, 0], [], []>} : vector<32x32xbf16>, vector<8x32xbf16>, vector<32x8xf32> -> vector<32x8xf32>
    %c1_33 = arith.constant 1 : index
    %c0_34 = arith.constant 0 : index
    %87 = vector.load %arg1[%c1_33, %c0_34] : memref<2x8xf32, #tpu.memory_space<vmem>>, vector<1x8xf32>
    %88 = vector.broadcast %87 : vector<1x8xf32> to vector<32x8xf32>
    %89 = arith.addf %86, %88 : vector<32x8xf32>
    %cst_35 = arith.constant dense<0xFF800000> : vector<32xf32>
    %90 = vector.multi_reduction <maximumf>, %89, %cst_35 [1] : vector<32x8xf32> to vector<32xf32>
    %91 = vector.shape_cast %90 : vector<32xf32> to vector<32x1xf32>
    %92 = vector.broadcast %91 : vector<32x1xf32> to vector<32x8xf32>
    %93 = arith.subf %89, %92 : vector<32x8xf32>
    %94 = math.exp %93 : vector<32x8xf32>
    %cst_36 = arith.constant dense<0.000000e+00> : vector<32xf32>
    %95 = vector.multi_reduction <add>, %94, %cst_36 [1] : vector<32x8xf32> to vector<32xf32>
    %96 = vector.shape_cast %95 : vector<32xf32> to vector<32x1xf32>
    %97 = tpu.reciprocal %96 {approx = true} : vector<32x1xf32> -> vector<32x1xf32>
    %98 = vector.broadcast %97 : vector<32x1xf32> to vector<32x8xf32>
    %99 = arith.mulf %94, %98 : vector<32x8xf32>
    %100 = arith.truncf %99 : vector<32x8xf32> to vector<32x8xbf16>
    %101 = arith.truncf %81 : vector<8x32xf32> to vector<8x32xbf16>
    %cst_37 = arith.constant dense<0.000000e+00> : vector<32x32xf32>
    %102 = tpu.matmul %100, %101, %cst_37 {dimension_numbers = #tpu.dot_dimension_numbers<[1], [0], [0], [1], [0, 0, 1, 1], [], []>} : vector<32x8xbf16>, vector<8x32xbf16>, vector<32x32xf32> -> vector<32x32xf32>
    %103 = arith.mulf %102, %1 : vector<32x32xf32>
    %104 = vector.extract_strided_slice %103 {offsets = [0, 0], sizes = [8, 32], strides = [1, 1]} : vector<32x32xf32> to vector<8x32xf32>
    %105 = vector.extract_strided_slice %103 {offsets = [8, 0], sizes = [8, 32], strides = [1, 1]} : vector<32x32xf32> to vector<8x32xf32>
    %106 = arith.addf %104, %105 : vector<8x32xf32>
    %107 = vector.extract_strided_slice %103 {offsets = [16, 0], sizes = [8, 32], strides = [1, 1]} : vector<32x32xf32> to vector<8x32xf32>
    %108 = arith.addf %106, %107 : vector<8x32xf32>
    %109 = vector.extract_strided_slice %103 {offsets = [24, 0], sizes = [8, 32], strides = [1, 1]} : vector<32x32xf32> to vector<8x32xf32>
    %110 = arith.addf %108, %109 : vector<8x32xf32>
    %111 = tpu.concatenate %78, %110 in 0 : vector<8x32xf32>, vector<8x32xf32> -> vector<16x32xf32>
    %112 = arith.truncf %111 : vector<16x32xf32> to vector<16x32xbf16>
    %c3_38 = arith.constant 3 : index
    %c0_39 = arith.constant 0 : index
    %c0_40 = arith.constant 0 : index
    %113 = vector.load %arg3[%c3_38, %c0_39, %c0_40] : memref<8x32x32xbf16, #tpu.memory_space<vmem>>, vector<1x32x32xbf16>
    %114 = vector.shape_cast %113 : vector<1x32x32xbf16> to vector<32x32xbf16>
    %cst_41 = arith.constant dense<0.000000e+00> : vector<16x32xf32>
    %115 = tpu.matmul %112, %114, %cst_41 {dimension_numbers = #tpu.dot_dimension_numbers<[1], [0], [0], [1], [0, 0, 1, 1], [], []>} : vector<16x32xbf16>, vector<32x32xbf16>, vector<16x32xf32> -> vector<16x32xf32>
    %c5 = arith.constant 5 : index
    %c0_42 = arith.constant 0 : index
    %116 = vector.load %arg6[%c5, %c0_42] : memref<20x32xf32, #tpu.memory_space<vmem>>, vector<1x32xf32>
    %117 = vector.broadcast %116 : vector<1x32xf32> to vector<16x32xf32>
    %118 = arith.addf %115, %117 : vector<16x32xf32>
    %119 = arith.addf %25, %118 : vector<16x32xf32>
    %c6 = arith.constant 6 : index
    %c0_43 = arith.constant 0 : index
    %120 = vector.load %arg6[%c6, %c0_43] : memref<20x32xf32, #tpu.memory_space<vmem>>, vector<1x32xf32>
    %c7 = arith.constant 7 : index
    %c0_44 = arith.constant 0 : index
    %121 = vector.load %arg6[%c7, %c0_44] : memref<20x32xf32, #tpu.memory_space<vmem>>, vector<1x32xf32>
    %cst_45 = arith.constant dense<0.000000e+00> : vector<16xf32>
    %122 = vector.multi_reduction <add>, %119, %cst_45 [1] : vector<16x32xf32> to vector<16xf32>
    %123 = vector.shape_cast %122 : vector<16xf32> to vector<16x1xf32>
    %cst_46 = arith.constant 3.200000e+01 : f32
    %124 = vector.broadcast %cst_46 : f32 to vector<16x1xf32>
    %125 = arith.divf %123, %124 : vector<16x1xf32>
    %126 = vector.broadcast %125 : vector<16x1xf32> to vector<16x32xf32>
    %127 = arith.subf %119, %126 : vector<16x32xf32>
    %128 = arith.mulf %127, %127 : vector<16x32xf32>
    %cst_47 = arith.constant dense<0.000000e+00> : vector<16xf32>
    %129 = vector.multi_reduction <add>, %128, %cst_47 [1] : vector<16x32xf32> to vector<16xf32>
    %130 = vector.shape_cast %129 : vector<16xf32> to vector<16x1xf32>
    %cst_48 = arith.constant 3.200000e+01 : f32
    %131 = vector.broadcast %cst_48 : f32 to vector<16x1xf32>
    %132 = arith.divf %130, %131 : vector<16x1xf32>
    %133 = vector.broadcast %125 : vector<16x1xf32> to vector<16x32xf32>
    %134 = arith.subf %119, %133 : vector<16x32xf32>
    %cst_49 = arith.constant 9.99999974E-6 : f32
    %135 = vector.broadcast %cst_49 : f32 to vector<16x1xf32>
    %136 = arith.addf %132, %135 : vector<16x1xf32>
    %137 = math.rsqrt %136 : vector<16x1xf32>
    %138 = vector.broadcast %137 : vector<16x1xf32> to vector<16x32xf32>
    %139 = arith.mulf %134, %138 : vector<16x32xf32>
    %140 = vector.broadcast %120 : vector<1x32xf32> to vector<16x32xf32>
    %141 = arith.mulf %139, %140 : vector<16x32xf32>
    %142 = vector.broadcast %121 : vector<1x32xf32> to vector<16x32xf32>
    %143 = arith.addf %141, %142 : vector<16x32xf32>
    %144 = arith.truncf %143 : vector<16x32xf32> to vector<16x32xbf16>
    %c0_50 = arith.constant 0 : index
    %c0_51 = arith.constant 0 : index
    %c0_52 = arith.constant 0 : index
    %145 = vector.load %arg4[%c0_50, %c0_51, %c0_52] : memref<2x32x64xbf16, #tpu.memory_space<vmem>>, vector<1x32x64xbf16>
    %146 = vector.shape_cast %145 : vector<1x32x64xbf16> to vector<32x64xbf16>
    %cst_53 = arith.constant dense<0.000000e+00> : vector<16x64xf32>
    %147 = tpu.matmul %144, %146, %cst_53 {dimension_numbers = #tpu.dot_dimension_numbers<[1], [0], [0], [1], [0, 0, 1, 1], [], []>} : vector<16x32xbf16>, vector<32x64xbf16>, vector<16x64xf32> -> vector<16x64xf32>
    %c0_54 = arith.constant 0 : index
    %c0_55 = arith.constant 0 : index
    %148 = vector.load %arg7[%c0_54, %c0_55] : memref<2x64xf32, #tpu.memory_space<vmem>>, vector<1x64xf32>
    %149 = vector.broadcast %148 : vector<1x64xf32> to vector<16x64xf32>
    %150 = arith.addf %147, %149 : vector<16x64xf32>
    %151 = arith.mulf %150, %150 : vector<16x64xf32>
    %152 = arith.mulf %150, %151 : vector<16x64xf32>
    %cst_56 = arith.constant 4.471500e-02 : f32
    %153 = vector.broadcast %cst_56 : f32 to vector<16x64xf32>
    %154 = arith.mulf %153, %152 : vector<16x64xf32>
    %155 = arith.addf %150, %154 : vector<16x64xf32>
    %cst_57 = arith.constant 0.797884583 : f32
    %156 = vector.broadcast %cst_57 : f32 to vector<16x64xf32>
    %157 = arith.mulf %156, %155 : vector<16x64xf32>
    %158 = math.tanh %157 : vector<16x64xf32>
    %cst_58 = arith.constant 1.000000e+00 : f32
    %159 = vector.broadcast %cst_58 : f32 to vector<16x64xf32>
    %160 = arith.addf %159, %158 : vector<16x64xf32>
    %cst_59 = arith.constant 5.000000e-01 : f32
    %161 = vector.broadcast %cst_59 : f32 to vector<16x64xf32>
    %162 = arith.mulf %161, %160 : vector<16x64xf32>
    %163 = arith.mulf %150, %162 : vector<16x64xf32>
    %164 = arith.truncf %163 : vector<16x64xf32> to vector<16x64xbf16>
    %c0_60 = arith.constant 0 : index
    %c0_61 = arith.constant 0 : index
    %c0_62 = arith.constant 0 : index
    %165 = vector.load %arg5[%c0_60, %c0_61, %c0_62] : memref<2x64x32xbf16, #tpu.memory_space<vmem>>, vector<1x64x32xbf16>
    %166 = vector.shape_cast %165 : vector<1x64x32xbf16> to vector<64x32xbf16>
    %cst_63 = arith.constant dense<0.000000e+00> : vector<16x32xf32>
    %167 = tpu.matmul %164, %166, %cst_63 {dimension_numbers = #tpu.dot_dimension_numbers<[1], [0], [0], [1], [0, 0, 1, 1], [], []>} : vector<16x64xbf16>, vector<64x32xbf16>, vector<16x32xf32> -> vector<16x32xf32>
    %c8 = arith.constant 8 : index
    %c0_64 = arith.constant 0 : index
    %168 = vector.load %arg6[%c8, %c0_64] : memref<20x32xf32, #tpu.memory_space<vmem>>, vector<1x32xf32>
    %169 = vector.broadcast %168 : vector<1x32xf32> to vector<16x32xf32>
    %170 = arith.addf %167, %169 : vector<16x32xf32>
    %171 = arith.addf %143, %170 : vector<16x32xf32>
    %c9 = arith.constant 9 : index
    %c0_65 = arith.constant 0 : index
    %172 = vector.load %arg6[%c9, %c0_65] : memref<20x32xf32, #tpu.memory_space<vmem>>, vector<1x32xf32>
    %c10 = arith.constant 10 : index
    %c0_66 = arith.constant 0 : index
    %173 = vector.load %arg6[%c10, %c0_66] : memref<20x32xf32, #tpu.memory_space<vmem>>, vector<1x32xf32>
    %cst_67 = arith.constant dense<0.000000e+00> : vector<16xf32>
    %174 = vector.multi_reduction <add>, %171, %cst_67 [1] : vector<16x32xf32> to vector<16xf32>
    %175 = vector.shape_cast %174 : vector<16xf32> to vector<16x1xf32>
    %cst_68 = arith.constant 3.200000e+01 : f32
    %176 = vector.broadcast %cst_68 : f32 to vector<16x1xf32>
    %177 = arith.divf %175, %176 : vector<16x1xf32>
    %178 = vector.broadcast %177 : vector<16x1xf32> to vector<16x32xf32>
    %179 = arith.subf %171, %178 : vector<16x32xf32>
    %180 = arith.mulf %179, %179 : vector<16x32xf32>
    %cst_69 = arith.constant dense<0.000000e+00> : vector<16xf32>
    %181 = vector.multi_reduction <add>, %180, %cst_69 [1] : vector<16x32xf32> to vector<16xf32>
    %182 = vector.shape_cast %181 : vector<16xf32> to vector<16x1xf32>
    %cst_70 = arith.constant 3.200000e+01 : f32
    %183 = vector.broadcast %cst_70 : f32 to vector<16x1xf32>
    %184 = arith.divf %182, %183 : vector<16x1xf32>
    %185 = vector.broadcast %177 : vector<16x1xf32> to vector<16x32xf32>
    %186 = arith.subf %171, %185 : vector<16x32xf32>
    %cst_71 = arith.constant 9.99999974E-6 : f32
    %187 = vector.broadcast %cst_71 : f32 to vector<16x1xf32>
    %188 = arith.addf %184, %187 : vector<16x1xf32>
    %189 = math.rsqrt %188 : vector<16x1xf32>
    %190 = vector.broadcast %189 : vector<16x1xf32> to vector<16x32xf32>
    %191 = arith.mulf %186, %190 : vector<16x32xf32>
    %192 = vector.broadcast %172 : vector<1x32xf32> to vector<16x32xf32>
    %193 = arith.mulf %191, %192 : vector<16x32xf32>
    %194 = vector.broadcast %173 : vector<1x32xf32> to vector<16x32xf32>
    %195 = arith.addf %193, %194 : vector<16x32xf32>
    %196 = arith.truncf %195 : vector<16x32xf32> to vector<16x32xbf16>
    %c4_72 = arith.constant 4 : index
    %c0_73 = arith.constant 0 : index
    %c0_74 = arith.constant 0 : index
    %197 = vector.load %arg3[%c4_72, %c0_73, %c0_74] : memref<8x32x32xbf16, #tpu.memory_space<vmem>>, vector<1x32x32xbf16>
    %198 = vector.shape_cast %197 : vector<1x32x32xbf16> to vector<32x32xbf16>
    %cst_75 = arith.constant dense<0.000000e+00> : vector<16x32xf32>
    %199 = tpu.matmul %196, %198, %cst_75 {dimension_numbers = #tpu.dot_dimension_numbers<[1], [0], [0], [1], [0, 0, 1, 1], [], []>} : vector<16x32xbf16>, vector<32x32xbf16>, vector<16x32xf32> -> vector<16x32xf32>
    %c11 = arith.constant 11 : index
    %c0_76 = arith.constant 0 : index
    %200 = vector.load %arg6[%c11, %c0_76] : memref<20x32xf32, #tpu.memory_space<vmem>>, vector<1x32xf32>
    %201 = vector.broadcast %200 : vector<1x32xf32> to vector<16x32xf32>
    %202 = arith.addf %199, %201 : vector<16x32xf32>
    %c5_77 = arith.constant 5 : index
    %c0_78 = arith.constant 0 : index
    %c0_79 = arith.constant 0 : index
    %203 = vector.load %arg3[%c5_77, %c0_78, %c0_79] : memref<8x32x32xbf16, #tpu.memory_space<vmem>>, vector<1x32x32xbf16>
    %204 = vector.shape_cast %203 : vector<1x32x32xbf16> to vector<32x32xbf16>
    %cst_80 = arith.constant dense<0.000000e+00> : vector<16x32xf32>
    %205 = tpu.matmul %196, %204, %cst_80 {dimension_numbers = #tpu.dot_dimension_numbers<[1], [0], [0], [1], [0, 0, 1, 1], [], []>} : vector<16x32xbf16>, vector<32x32xbf16>, vector<16x32xf32> -> vector<16x32xf32>
    %c12 = arith.constant 12 : index
    %c0_81 = arith.constant 0 : index
    %206 = vector.load %arg6[%c12, %c0_81] : memref<20x32xf32, #tpu.memory_space<vmem>>, vector<1x32xf32>
    %207 = vector.broadcast %206 : vector<1x32xf32> to vector<16x32xf32>
    %208 = arith.addf %205, %207 : vector<16x32xf32>
    %c6_82 = arith.constant 6 : index
    %c0_83 = arith.constant 0 : index
    %c0_84 = arith.constant 0 : index
    %209 = vector.load %arg3[%c6_82, %c0_83, %c0_84] : memref<8x32x32xbf16, #tpu.memory_space<vmem>>, vector<1x32x32xbf16>
    %210 = vector.shape_cast %209 : vector<1x32x32xbf16> to vector<32x32xbf16>
    %cst_85 = arith.constant dense<0.000000e+00> : vector<16x32xf32>
    %211 = tpu.matmul %196, %210, %cst_85 {dimension_numbers = #tpu.dot_dimension_numbers<[1], [0], [0], [1], [0, 0, 1, 1], [], []>} : vector<16x32xbf16>, vector<32x32xbf16>, vector<16x32xf32> -> vector<16x32xf32>
    %c13 = arith.constant 13 : index
    %c0_86 = arith.constant 0 : index
    %212 = vector.load %arg6[%c13, %c0_86] : memref<20x32xf32, #tpu.memory_space<vmem>>, vector<1x32xf32>
    %213 = vector.broadcast %212 : vector<1x32xf32> to vector<16x32xf32>
    %214 = arith.addf %211, %213 : vector<16x32xf32>
    %cst_87 = arith.constant 0.353553385 : f32
    %215 = vector.broadcast %cst_87 : f32 to vector<16x32xf32>
    %216 = arith.mulf %202, %215 : vector<16x32xf32>
    %217 = vector.extract_strided_slice %216 {offsets = [0, 0], sizes = [8, 32], strides = [1, 1]} : vector<16x32xf32> to vector<8x32xf32>
    %218 = vector.extract_strided_slice %208 {offsets = [0, 0], sizes = [8, 32], strides = [1, 1]} : vector<16x32xf32> to vector<8x32xf32>
    %219 = vector.extract_strided_slice %214 {offsets = [0, 0], sizes = [8, 32], strides = [1, 1]} : vector<16x32xf32> to vector<8x32xf32>
    %220 = tpu.concatenate %217, %217, %217, %217 in 0 : vector<8x32xf32>, vector<8x32xf32>, vector<8x32xf32>, vector<8x32xf32> -> vector<32x32xf32>
    %221 = arith.mulf %220, %1 : vector<32x32xf32>
    %222 = arith.truncf %221 : vector<32x32xf32> to vector<32x32xbf16>
    %223 = arith.truncf %218 : vector<8x32xf32> to vector<8x32xbf16>
    %cst_88 = arith.constant dense<0.000000e+00> : vector<32x8xf32>
    %224 = tpu.matmul %222, %223, %cst_88 {dimension_numbers = #tpu.dot_dimension_numbers<[1], [1], [0], [0], [0, 0, 1, 0], [], []>} : vector<32x32xbf16>, vector<8x32xbf16>, vector<32x8xf32> -> vector<32x8xf32>
    %c0_89 = arith.constant 0 : index
    %c0_90 = arith.constant 0 : index
    %225 = vector.load %arg1[%c0_89, %c0_90] : memref<2x8xf32, #tpu.memory_space<vmem>>, vector<1x8xf32>
    %226 = vector.broadcast %225 : vector<1x8xf32> to vector<32x8xf32>
    %227 = arith.addf %224, %226 : vector<32x8xf32>
    %cst_91 = arith.constant dense<0xFF800000> : vector<32xf32>
    %228 = vector.multi_reduction <maximumf>, %227, %cst_91 [1] : vector<32x8xf32> to vector<32xf32>
    %229 = vector.shape_cast %228 : vector<32xf32> to vector<32x1xf32>
    %230 = vector.broadcast %229 : vector<32x1xf32> to vector<32x8xf32>
    %231 = arith.subf %227, %230 : vector<32x8xf32>
    %232 = math.exp %231 : vector<32x8xf32>
    %cst_92 = arith.constant dense<0.000000e+00> : vector<32xf32>
    %233 = vector.multi_reduction <add>, %232, %cst_92 [1] : vector<32x8xf32> to vector<32xf32>
    %234 = vector.shape_cast %233 : vector<32xf32> to vector<32x1xf32>
    %235 = tpu.reciprocal %234 {approx = true} : vector<32x1xf32> -> vector<32x1xf32>
    %236 = vector.broadcast %235 : vector<32x1xf32> to vector<32x8xf32>
    %237 = arith.mulf %232, %236 : vector<32x8xf32>
    %238 = arith.truncf %237 : vector<32x8xf32> to vector<32x8xbf16>
    %239 = arith.truncf %219 : vector<8x32xf32> to vector<8x32xbf16>
    %cst_93 = arith.constant dense<0.000000e+00> : vector<32x32xf32>
    %240 = tpu.matmul %238, %239, %cst_93 {dimension_numbers = #tpu.dot_dimension_numbers<[1], [0], [0], [1], [0, 0, 1, 1], [], []>} : vector<32x8xbf16>, vector<8x32xbf16>, vector<32x32xf32> -> vector<32x32xf32>
    %241 = arith.mulf %240, %1 : vector<32x32xf32>
    %242 = vector.extract_strided_slice %241 {offsets = [0, 0], sizes = [8, 32], strides = [1, 1]} : vector<32x32xf32> to vector<8x32xf32>
    %243 = vector.extract_strided_slice %241 {offsets = [8, 0], sizes = [8, 32], strides = [1, 1]} : vector<32x32xf32> to vector<8x32xf32>
    %244 = arith.addf %242, %243 : vector<8x32xf32>
    %245 = vector.extract_strided_slice %241 {offsets = [16, 0], sizes = [8, 32], strides = [1, 1]} : vector<32x32xf32> to vector<8x32xf32>
    %246 = arith.addf %244, %245 : vector<8x32xf32>
    %247 = vector.extract_strided_slice %241 {offsets = [24, 0], sizes = [8, 32], strides = [1, 1]} : vector<32x32xf32> to vector<8x32xf32>
    %248 = arith.addf %246, %247 : vector<8x32xf32>
    %249 = vector.extract_strided_slice %216 {offsets = [8, 0], sizes = [8, 32], strides = [1, 1]} : vector<16x32xf32> to vector<8x32xf32>
    %250 = vector.extract_strided_slice %208 {offsets = [8, 0], sizes = [8, 32], strides = [1, 1]} : vector<16x32xf32> to vector<8x32xf32>
    %251 = vector.extract_strided_slice %214 {offsets = [8, 0], sizes = [8, 32], strides = [1, 1]} : vector<16x32xf32> to vector<8x32xf32>
    %252 = tpu.concatenate %249, %249, %249, %249 in 0 : vector<8x32xf32>, vector<8x32xf32>, vector<8x32xf32>, vector<8x32xf32> -> vector<32x32xf32>
    %253 = arith.mulf %252, %1 : vector<32x32xf32>
    %254 = arith.truncf %253 : vector<32x32xf32> to vector<32x32xbf16>
    %255 = arith.truncf %250 : vector<8x32xf32> to vector<8x32xbf16>
    %cst_94 = arith.constant dense<0.000000e+00> : vector<32x8xf32>
    %256 = tpu.matmul %254, %255, %cst_94 {dimension_numbers = #tpu.dot_dimension_numbers<[1], [1], [0], [0], [0, 0, 1, 0], [], []>} : vector<32x32xbf16>, vector<8x32xbf16>, vector<32x8xf32> -> vector<32x8xf32>
    %c1_95 = arith.constant 1 : index
    %c0_96 = arith.constant 0 : index
    %257 = vector.load %arg1[%c1_95, %c0_96] : memref<2x8xf32, #tpu.memory_space<vmem>>, vector<1x8xf32>
    %258 = vector.broadcast %257 : vector<1x8xf32> to vector<32x8xf32>
    %259 = arith.addf %256, %258 : vector<32x8xf32>
    %cst_97 = arith.constant dense<0xFF800000> : vector<32xf32>
    %260 = vector.multi_reduction <maximumf>, %259, %cst_97 [1] : vector<32x8xf32> to vector<32xf32>
    %261 = vector.shape_cast %260 : vector<32xf32> to vector<32x1xf32>
    %262 = vector.broadcast %261 : vector<32x1xf32> to vector<32x8xf32>
    %263 = arith.subf %259, %262 : vector<32x8xf32>
    %264 = math.exp %263 : vector<32x8xf32>
    %cst_98 = arith.constant dense<0.000000e+00> : vector<32xf32>
    %265 = vector.multi_reduction <add>, %264, %cst_98 [1] : vector<32x8xf32> to vector<32xf32>
    %266 = vector.shape_cast %265 : vector<32xf32> to vector<32x1xf32>
    %267 = tpu.reciprocal %266 {approx = true} : vector<32x1xf32> -> vector<32x1xf32>
    %268 = vector.broadcast %267 : vector<32x1xf32> to vector<32x8xf32>
    %269 = arith.mulf %264, %268 : vector<32x8xf32>
    %270 = arith.truncf %269 : vector<32x8xf32> to vector<32x8xbf16>
    %271 = arith.truncf %251 : vector<8x32xf32> to vector<8x32xbf16>
    %cst_99 = arith.constant dense<0.000000e+00> : vector<32x32xf32>
    %272 = tpu.matmul %270, %271, %cst_99 {dimension_numbers = #tpu.dot_dimension_numbers<[1], [0], [0], [1], [0, 0, 1, 1], [], []>} : vector<32x8xbf16>, vector<8x32xbf16>, vector<32x32xf32> -> vector<32x32xf32>
    %273 = arith.mulf %272, %1 : vector<32x32xf32>
    %274 = vector.extract_strided_slice %273 {offsets = [0, 0], sizes = [8, 32], strides = [1, 1]} : vector<32x32xf32> to vector<8x32xf32>
    %275 = vector.extract_strided_slice %273 {offsets = [8, 0], sizes = [8, 32], strides = [1, 1]} : vector<32x32xf32> to vector<8x32xf32>
    %276 = arith.addf %274, %275 : vector<8x32xf32>
    %277 = vector.extract_strided_slice %273 {offsets = [16, 0], sizes = [8, 32], strides = [1, 1]} : vector<32x32xf32> to vector<8x32xf32>
    %278 = arith.addf %276, %277 : vector<8x32xf32>
    %279 = vector.extract_strided_slice %273 {offsets = [24, 0], sizes = [8, 32], strides = [1, 1]} : vector<32x32xf32> to vector<8x32xf32>
    %280 = arith.addf %278, %279 : vector<8x32xf32>
    %281 = tpu.concatenate %248, %280 in 0 : vector<8x32xf32>, vector<8x32xf32> -> vector<16x32xf32>
    %282 = arith.truncf %281 : vector<16x32xf32> to vector<16x32xbf16>
    %c7_100 = arith.constant 7 : index
    %c0_101 = arith.constant 0 : index
    %c0_102 = arith.constant 0 : index
    %283 = vector.load %arg3[%c7_100, %c0_101, %c0_102] : memref<8x32x32xbf16, #tpu.memory_space<vmem>>, vector<1x32x32xbf16>
    %284 = vector.shape_cast %283 : vector<1x32x32xbf16> to vector<32x32xbf16>
    %cst_103 = arith.constant dense<0.000000e+00> : vector<16x32xf32>
    %285 = tpu.matmul %282, %284, %cst_103 {dimension_numbers = #tpu.dot_dimension_numbers<[1], [0], [0], [1], [0, 0, 1, 1], [], []>} : vector<16x32xbf16>, vector<32x32xbf16>, vector<16x32xf32> -> vector<16x32xf32>
    %c14 = arith.constant 14 : index
    %c0_104 = arith.constant 0 : index
    %286 = vector.load %arg6[%c14, %c0_104] : memref<20x32xf32, #tpu.memory_space<vmem>>, vector<1x32xf32>
    %287 = vector.broadcast %286 : vector<1x32xf32> to vector<16x32xf32>
    %288 = arith.addf %285, %287 : vector<16x32xf32>
    %289 = arith.addf %195, %288 : vector<16x32xf32>
    %c15 = arith.constant 15 : index
    %c0_105 = arith.constant 0 : index
    %290 = vector.load %arg6[%c15, %c0_105] : memref<20x32xf32, #tpu.memory_space<vmem>>, vector<1x32xf32>
    %c16 = arith.constant 16 : index
    %c0_106 = arith.constant 0 : index
    %291 = vector.load %arg6[%c16, %c0_106] : memref<20x32xf32, #tpu.memory_space<vmem>>, vector<1x32xf32>
    %cst_107 = arith.constant dense<0.000000e+00> : vector<16xf32>
    %292 = vector.multi_reduction <add>, %289, %cst_107 [1] : vector<16x32xf32> to vector<16xf32>
    %293 = vector.shape_cast %292 : vector<16xf32> to vector<16x1xf32>
    %cst_108 = arith.constant 3.200000e+01 : f32
    %294 = vector.broadcast %cst_108 : f32 to vector<16x1xf32>
    %295 = arith.divf %293, %294 : vector<16x1xf32>
    %296 = vector.broadcast %295 : vector<16x1xf32> to vector<16x32xf32>
    %297 = arith.subf %289, %296 : vector<16x32xf32>
    %298 = arith.mulf %297, %297 : vector<16x32xf32>
    %cst_109 = arith.constant dense<0.000000e+00> : vector<16xf32>
    %299 = vector.multi_reduction <add>, %298, %cst_109 [1] : vector<16x32xf32> to vector<16xf32>
    %300 = vector.shape_cast %299 : vector<16xf32> to vector<16x1xf32>
    %cst_110 = arith.constant 3.200000e+01 : f32
    %301 = vector.broadcast %cst_110 : f32 to vector<16x1xf32>
    %302 = arith.divf %300, %301 : vector<16x1xf32>
    %303 = vector.broadcast %295 : vector<16x1xf32> to vector<16x32xf32>
    %304 = arith.subf %289, %303 : vector<16x32xf32>
    %cst_111 = arith.constant 9.99999974E-6 : f32
    %305 = vector.broadcast %cst_111 : f32 to vector<16x1xf32>
    %306 = arith.addf %302, %305 : vector<16x1xf32>
    %307 = math.rsqrt %306 : vector<16x1xf32>
    %308 = vector.broadcast %307 : vector<16x1xf32> to vector<16x32xf32>
    %309 = arith.mulf %304, %308 : vector<16x32xf32>
    %310 = vector.broadcast %290 : vector<1x32xf32> to vector<16x32xf32>
    %311 = arith.mulf %309, %310 : vector<16x32xf32>
    %312 = vector.broadcast %291 : vector<1x32xf32> to vector<16x32xf32>
    %313 = arith.addf %311, %312 : vector<16x32xf32>
    %314 = arith.truncf %313 : vector<16x32xf32> to vector<16x32xbf16>
    %c1_112 = arith.constant 1 : index
    %c0_113 = arith.constant 0 : index
    %c0_114 = arith.constant 0 : index
    %315 = vector.load %arg4[%c1_112, %c0_113, %c0_114] : memref<2x32x64xbf16, #tpu.memory_space<vmem>>, vector<1x32x64xbf16>
    %316 = vector.shape_cast %315 : vector<1x32x64xbf16> to vector<32x64xbf16>
    %cst_115 = arith.constant dense<0.000000e+00> : vector<16x64xf32>
    %317 = tpu.matmul %314, %316, %cst_115 {dimension_numbers = #tpu.dot_dimension_numbers<[1], [0], [0], [1], [0, 0, 1, 1], [], []>} : vector<16x32xbf16>, vector<32x64xbf16>, vector<16x64xf32> -> vector<16x64xf32>
    %c1_116 = arith.constant 1 : index
    %c0_117 = arith.constant 0 : index
    %318 = vector.load %arg7[%c1_116, %c0_117] : memref<2x64xf32, #tpu.memory_space<vmem>>, vector<1x64xf32>
    %319 = vector.broadcast %318 : vector<1x64xf32> to vector<16x64xf32>
    %320 = arith.addf %317, %319 : vector<16x64xf32>
    %321 = arith.mulf %320, %320 : vector<16x64xf32>
    %322 = arith.mulf %320, %321 : vector<16x64xf32>
    %cst_118 = arith.constant 4.471500e-02 : f32
    %323 = vector.broadcast %cst_118 : f32 to vector<16x64xf32>
    %324 = arith.mulf %323, %322 : vector<16x64xf32>
    %325 = arith.addf %320, %324 : vector<16x64xf32>
    %cst_119 = arith.constant 0.797884583 : f32
    %326 = vector.broadcast %cst_119 : f32 to vector<16x64xf32>
    %327 = arith.mulf %326, %325 : vector<16x64xf32>
    %328 = math.tanh %327 : vector<16x64xf32>
    %cst_120 = arith.constant 1.000000e+00 : f32
    %329 = vector.broadcast %cst_120 : f32 to vector<16x64xf32>
    %330 = arith.addf %329, %328 : vector<16x64xf32>
    %cst_121 = arith.constant 5.000000e-01 : f32
    %331 = vector.broadcast %cst_121 : f32 to vector<16x64xf32>
    %332 = arith.mulf %331, %330 : vector<16x64xf32>
    %333 = arith.mulf %320, %332 : vector<16x64xf32>
    %334 = arith.truncf %333 : vector<16x64xf32> to vector<16x64xbf16>
    %c1_122 = arith.constant 1 : index
    %c0_123 = arith.constant 0 : index
    %c0_124 = arith.constant 0 : index
    %335 = vector.load %arg5[%c1_122, %c0_123, %c0_124] : memref<2x64x32xbf16, #tpu.memory_space<vmem>>, vector<1x64x32xbf16>
    %336 = vector.shape_cast %335 : vector<1x64x32xbf16> to vector<64x32xbf16>
    %cst_125 = arith.constant dense<0.000000e+00> : vector<16x32xf32>
    %337 = tpu.matmul %334, %336, %cst_125 {dimension_numbers = #tpu.dot_dimension_numbers<[1], [0], [0], [1], [0, 0, 1, 1], [], []>} : vector<16x64xbf16>, vector<64x32xbf16>, vector<16x32xf32> -> vector<16x32xf32>
    %c17 = arith.constant 17 : index
    %c0_126 = arith.constant 0 : index
    %338 = vector.load %arg6[%c17, %c0_126] : memref<20x32xf32, #tpu.memory_space<vmem>>, vector<1x32xf32>
    %339 = vector.broadcast %338 : vector<1x32xf32> to vector<16x32xf32>
    %340 = arith.addf %337, %339 : vector<16x32xf32>
    %341 = arith.addf %313, %340 : vector<16x32xf32>
    %c18 = arith.constant 18 : index
    %c0_127 = arith.constant 0 : index
    %342 = vector.load %arg6[%c18, %c0_127] : memref<20x32xf32, #tpu.memory_space<vmem>>, vector<1x32xf32>
    %c19 = arith.constant 19 : index
    %c0_128 = arith.constant 0 : index
    %343 = vector.load %arg6[%c19, %c0_128] : memref<20x32xf32, #tpu.memory_space<vmem>>, vector<1x32xf32>
    %cst_129 = arith.constant dense<0.000000e+00> : vector<16xf32>
    %344 = vector.multi_reduction <add>, %341, %cst_129 [1] : vector<16x32xf32> to vector<16xf32>
    %345 = vector.shape_cast %344 : vector<16xf32> to vector<16x1xf32>
    %cst_130 = arith.constant 3.200000e+01 : f32
    %346 = vector.broadcast %cst_130 : f32 to vector<16x1xf32>
    %347 = arith.divf %345, %346 : vector<16x1xf32>
    %348 = vector.broadcast %347 : vector<16x1xf32> to vector<16x32xf32>
    %349 = arith.subf %341, %348 : vector<16x32xf32>
    %350 = arith.mulf %349, %349 : vector<16x32xf32>
    %cst_131 = arith.constant dense<0.000000e+00> : vector<16xf32>
    %351 = vector.multi_reduction <add>, %350, %cst_131 [1] : vector<16x32xf32> to vector<16xf32>
    %352 = vector.shape_cast %351 : vector<16xf32> to vector<16x1xf32>
    %cst_132 = arith.constant 3.200000e+01 : f32
    %353 = vector.broadcast %cst_132 : f32 to vector<16x1xf32>
    %354 = arith.divf %352, %353 : vector<16x1xf32>
    %355 = vector.broadcast %347 : vector<16x1xf32> to vector<16x32xf32>
    %356 = arith.subf %341, %355 : vector<16x32xf32>
    %cst_133 = arith.constant 9.99999974E-6 : f32
    %357 = vector.broadcast %cst_133 : f32 to vector<16x1xf32>
    %358 = arith.addf %354, %357 : vector<16x1xf32>
    %359 = math.rsqrt %358 : vector<16x1xf32>
    %360 = vector.broadcast %359 : vector<16x1xf32> to vector<16x32xf32>
    %361 = arith.mulf %356, %360 : vector<16x32xf32>
    %362 = vector.broadcast %342 : vector<1x32xf32> to vector<16x32xf32>
    %363 = arith.mulf %361, %362 : vector<16x32xf32>
    %364 = vector.broadcast %343 : vector<1x32xf32> to vector<16x32xf32>
    %365 = arith.addf %363, %364 : vector<16x32xf32>
    %366 = vector.extract_strided_slice %365 {offsets = [7, 0], sizes = [1, 32], strides = [1, 1]} : vector<16x32xf32> to vector<1x32xf32>
    %367 = vector.extract_strided_slice %365 {offsets = [15, 0], sizes = [1, 32], strides = [1, 1]} : vector<16x32xf32> to vector<1x32xf32>
    %368 = tpu.concatenate %366, %367 in 0 : vector<1x32xf32>, vector<1x32xf32> -> vector<2x32xf32>
    %c0_134 = arith.constant 0 : index
    %c0_135 = arith.constant 0 : index
    %369 = vector.load %arg8[%c0_134, %c0_135] : memref<32x10xf32, #tpu.memory_space<vmem>>, vector<32x10xf32>
    %cst_136 = arith.constant dense<0.000000e+00> : vector<2x10xf32>
    %370 = tpu.matmul %368, %369, %cst_136 {dimension_numbers = #tpu.dot_dimension_numbers<[1], [0], [0], [1], [0, 0, 1, 1], [], []>} : vector<2x32xf32>, vector<32x10xf32>, vector<2x10xf32> -> vector<2x10xf32>
    %c0_137 = arith.constant 0 : index
    %c0_138 = arith.constant 0 : index
    %371 = vector.load %arg9[%c0_137, %c0_138] : memref<1x10xf32, #tpu.memory_space<vmem>>, vector<1x10xf32>
    %372 = vector.broadcast %371 : vector<1x10xf32> to vector<2x10xf32>
    %373 = arith.addf %370, %372 : vector<2x10xf32>
    %cst_139 = arith.constant dense<0xFF800000> : vector<2xf32>
    %374 = vector.multi_reduction <maximumf>, %373, %cst_139 [1] : vector<2x10xf32> to vector<2xf32>
    %375 = vector.shape_cast %374 : vector<2xf32> to vector<2x1xf32>
    %376 = vector.broadcast %375 : vector<2x1xf32> to vector<2x10xf32>
    %377 = arith.subf %373, %376 : vector<2x10xf32>
    %378 = math.exp %377 : vector<2x10xf32>
    %cst_140 = arith.constant dense<0.000000e+00> : vector<2xf32>
    %379 = vector.multi_reduction <add>, %378, %cst_140 [1] : vector<2x10xf32> to vector<2xf32>
    %380 = vector.shape_cast %379 : vector<2xf32> to vector<2x1xf32>
    %381 = tpu.reciprocal %380 {approx = true} : vector<2x1xf32> -> vector<2x1xf32>
    %382 = vector.broadcast %381 : vector<2x1xf32> to vector<2x10xf32>
    %383 = arith.mulf %378, %382 : vector<2x10xf32>
    %c0_141 = arith.constant 0 : index
    %c0_142 = arith.constant 0 : index
    %384 = vector.load %arg10[%c0_141, %c0_142] : memref<10x32xf32, #tpu.memory_space<vmem>>, vector<10x32xf32>
    %cst_143 = arith.constant dense<0.000000e+00> : vector<2x32xf32>
    %385 = tpu.matmul %383, %384, %cst_143 {dimension_numbers = #tpu.dot_dimension_numbers<[1], [0], [0], [1], [0, 0, 1, 1], [], []>} : vector<2x10xf32>, vector<10x32xf32>, vector<2x32xf32> -> vector<2x32xf32>
    %c0_144 = arith.constant 0 : index
    %c0_145 = arith.constant 0 : index
    %386 = vector.load %arg11[%c0_144, %c0_145] : memref<16x32xf32, #tpu.memory_space<vmem>>, vector<16x32xf32>
    tpu.vector_store %arg11[%c0_144, %c0_145], %365 {strides = array<i32>} : memref<16x32xf32, #tpu.memory_space<vmem>>, vector<16x32xf32>,
    %387 = vector.extract_strided_slice %385 {offsets = [0, 0], sizes = [1, 32], strides = [1, 1]} : vector<2x32xf32> to vector<1x32xf32>
    %c7_146 = arith.constant 7 : index
    %c0_147 = arith.constant 0 : index
    %388 = vector.load %arg11[%c7_146, %c0_147] : memref<16x32xf32, #tpu.memory_space<vmem>>, vector<1x32xf32>
    tpu.vector_store %arg11[%c7_146, %c0_147], %387 {strides = array<i32>} : memref<16x32xf32, #tpu.memory_space<vmem>>, vector<1x32xf32>,
    %389 = vector.extract_strided_slice %385 {offsets = [1, 0], sizes = [1, 32], strides = [1, 1]} : vector<2x32xf32> to vector<1x32xf32>
    %c15_148 = arith.constant 15 : index
    %c0_149 = arith.constant 0 : index
    %390 = vector.load %arg11[%c15_148, %c0_149] : memref<16x32xf32, #tpu.memory_space<vmem>>, vector<1x32xf32>
    tpu.vector_store %arg11[%c15_148, %c0_149], %389 {strides = array<i32>} : memref<16x32xf32, #tpu.memory_space<vmem>>, vector<1x32xf32>,
    return
  }
}

</mosaic_0001>

<llo_original>
// kernel: tpu_custom_call.1
$region0: #{tpu_custom_call.1}
  #allocation0 [shape = 'u32[]', space=smem, size = 0x4, offset = 0x4, fixed_abs, tag = 'smem constant byte address 0x4 - core index']
  #allocation1 [shape = 'u32[144,128]{1,0:T(1,128)}', space=vmem, size = 0x12000, scoped, tag = 'internal scratch']
  %s0 = inlined_call_operand.hbm [shape: f32[16,32], index: 0, kind: input, shape index: {}]
  %s1 = inlined_call_operand.vmem [shape: f32[2,8], index: 1, kind: input, shape index: {}]
  %s2 = inlined_call_operand.hbm [shape: f32[32,32], index: 2, kind: input, shape index: {}]
  %s3 = inlined_call_operand.vmem [shape: bf16[8,32,32], index: 3, kind: input, shape index: {}]
  %s4 = inlined_call_operand.hbm [shape: bf16[2,32,64], index: 4, kind: input, shape index: {}]
  %s5 = inlined_call_operand.vmem [shape: bf16[2,64,32], index: 5, kind: input, shape index: {}]
  %s6 = inlined_call_operand.hbm [shape: f32[20,32], index: 6, kind: input, shape index: {}]
  %s7 = inlined_call_operand.hbm [shape: f32[2,64], index: 7, kind: input, shape index: {}]
  %s8 = inlined_call_operand.vmem [shape: f32[32,10], index: 8, kind: input, shape index: {}]
  %s9 = inlined_call_operand.hbm [shape: f32[1,10], index: 9, kind: input, shape index: {}]
  %s10 = inlined_call_operand.vmem [shape: f32[10,32], index: 10, kind: input, shape index: {}]
  %s11 = inlined_call_operand.hbm [shape: f32[16,32], index: 11, kind: output, shape index: {}]
  %s12 = sld [smem:[#allocation0]]
  $region78: #{tpu_custom_call.1} parent=0
    _
  %s14 = ssub.s32 1, %s12
  %s15 = scalar_select 0, %s14, %s12
  $region1: #{tpu_custom_call.1} parent=0
    #allocation2 [shape = 'u8[8192]{0}', space=vmem, size = 0x2000, scoped, tag = 'input window, operand 0, single buffered']
    #allocation3 [shape = 's32[1]{0}', space=sflag, size = 0x4, scoped, tag = 'scoped memory for tpu_custom_call.1']
    #allocation4 [shape = 's32[1]{0}', space=sflag, size = 0x4, scoped, tag = 'scoped memory for tpu_custom_call.1']
    #allocation5 [shape = 'u8[16384]{0}', space=vmem, size = 0x4000, scoped, tag = 'input window, operand 2, single buffered']
    #allocation6 [shape = 's32[1]{0}', space=sflag, size = 0x4, scoped, tag = 'scoped memory for tpu_custom_call.1']
    #allocation7 [shape = 'u8[16384]{0}', space=vmem, size = 0x4000, scoped, tag = 'input window, operand 4, single buffered']
    #allocation8 [shape = 'u8[12288]{0}', space=vmem, size = 0x3000, scoped, tag = 'input window, operand 6, single buffered']
    #allocation9 [shape = 's32[1]{0}', space=sflag, size = 0x4, scoped, tag = 'scoped memory for tpu_custom_call.1']
    #allocation10 [shape = 'u8[1024]{0}', space=vmem, size = 0x400, scoped, tag = 'input window, operand 7, single buffered']
    #allocation11 [shape = 'u8[512]{0}', space=vmem, size = 0x400, scoped, tag = 'input window, operand 9, single buffered']
    #allocation12 [shape = 's32[1]{0}', space=sflag, size = 0x4, scoped, tag = 'scoped memory for tpu_custom_call.1']
    #allocation13 [shape = 'u8[8192]{0}', space=vmem, size = 0x2000, scoped, tag = 'output window, operand 0, single buffered']
    %16 = vsyncpa [#allocation3], 0
    %17 = vsyncpa [#allocation6], 0
    %18 = vsyncpa [#allocation9], 0
    %19 = vsyncpa [#allocation12], 0
    %20 = vsyncpa [#allocation4], 0
    // Predicated region
    $region2: #{tpu_custom_call.1} parent=1 // pred_check
      _
    $region3: #{tpu_custom_call.1} parent=1 // pred_check_branch
      %22 = sbr.rel (0) target = $region5
    $region4: #{tpu_custom_call.1} parent=1 // pred_region
      %s24 = ssub.s32 256, 256
      %25 = vsyncadd [#allocation3], %s24
      %s26 = sshll.u32 [#allocation2], 4
      %s27 = int_to_ptr.vmem [resolvable:$true] %s26
      %32 = dma.hbm_to_vmem [thread:$0]  %s0, 256, %s27, [#allocation3], 128, 128, 8
    $region5: #{tpu_custom_call.1} parent=1 // pred_fallthru
      _
    // Predicated region
    $region6: #{tpu_custom_call.1} parent=1 // pred_check
      _
    $region7: #{tpu_custom_call.1} parent=1 // pred_check_branch
      %34 = sbr.rel (0) target = $region9
    $region8: #{tpu_custom_call.1} parent=1 // pred_region
      _
    $region9: #{tpu_custom_call.1} parent=1 // pred_fallthru
      _
    // Predicated region
    $region10: #{tpu_custom_call.1} parent=1 // pred_check
      _
    $region11: #{tpu_custom_call.1} parent=1 // pred_check_branch
      %36 = sbr.rel (0) target = $region13
    $region12: #{tpu_custom_call.1} parent=1 // pred_region
      %s38 = ssub.s32 512, 512
      %39 = vsyncadd [#allocation6], %s38
      %s40 = sshll.u32 [#allocation5], 4
      %s41 = int_to_ptr.vmem [resolvable:$true] %s40
      %46 = dma.hbm_to_vmem [thread:$0]  %s2, 512, %s41, [#allocation6], 128, 128, 8
    $region13: #{tpu_custom_call.1} parent=1 // pred_fallthru
      _
    // Predicated region
    $region14: #{tpu_custom_call.1} parent=1 // pred_check
      _
    $region15: #{tpu_custom_call.1} parent=1 // pred_check_branch
      %48 = sbr.rel (0) target = $region17
    $region16: #{tpu_custom_call.1} parent=1 // pred_region
      _
    $region17: #{tpu_custom_call.1} parent=1 // pred_fallthru
      _
    // Predicated region
    $region18: #{tpu_custom_call.1} parent=1 // pred_check
      _
    $region19: #{tpu_custom_call.1} parent=1 // pred_check_branch
      %50 = sbr.rel (0) target = $region21
    $region20: #{tpu_custom_call.1} parent=1 // pred_region
      %s52 = ssub.s32 512, 512
      %53 = vsyncadd [#allocation6], %s52
      %s54 = sshll.u32 [#allocation7], 4
      %s55 = int_to_ptr.vmem [resolvable:$true] %s54
      %60 = dma.hbm_to_vmem [thread:$0]  %s4, 512, %s55, [#allocation6], 64, 64, 4
    $region21: #{tpu_custom_call.1} parent=1 // pred_fallthru
      _
    // Predicated region
    $region22: #{tpu_custom_call.1} parent=1 // pred_check
      _
    $region23: #{tpu_custom_call.1} parent=1 // pred_check_branch
      %62 = sbr.rel (0) target = $region25
    $region24: #{tpu_custom_call.1} parent=1 // pred_region
      _
    $region25: #{tpu_custom_call.1} parent=1 // pred_fallthru
      _
    // Predicated region
    $region26: #{tpu_custom_call.1} parent=1 // pred_check
      _
    $region27: #{tpu_custom_call.1} parent=1 // pred_check_branch
      %64 = sbr.rel (0) target = $region29
    $region28: #{tpu_custom_call.1} parent=1 // pred_region
      %s66 = ssub.s32 384, 384
      %67 = vsyncadd [#allocation9], %s66
      %s68 = sshll.u32 [#allocation8], 4
      %s69 = int_to_ptr.vmem [resolvable:$true] %s68
      %74 = dma.hbm_to_vmem [thread:$0]  %s6, 384, %s69, [#allocation9], 128, 128, 8
    $region29: #{tpu_custom_call.1} parent=1 // pred_fallthru
      _
    // Predicated region
    $region30: #{tpu_custom_call.1} parent=1 // pred_check
      _
    $region31: #{tpu_custom_call.1} parent=1 // pred_check_branch
      %76 = sbr.rel (0) target = $region33
    $region32: #{tpu_custom_call.1} parent=1 // pred_region
      %s78 = ssub.s32 32, 32
      %79 = vsyncadd [#allocation9], %s78
      %s81 = sshll.u32 [#allocation10], 4
      %s82 = int_to_ptr.vmem [resolvable:$true] %s81
      %84 = dma.hbm_to_vmem [thread:$0]  %s7, 32, %s82, [#allocation9]
    $region33: #{tpu_custom_call.1} parent=1 // pred_fallthru
      _
    // Predicated region
    $region34: #{tpu_custom_call.1} parent=1 // pred_check
      _
    $region35: #{tpu_custom_call.1} parent=1 // pred_check_branch
      %86 = sbr.rel (0) target = $region37
    $region36: #{tpu_custom_call.1} parent=1 // pred_region
      _
    $region37: #{tpu_custom_call.1} parent=1 // pred_fallthru
      _
    // Predicated region
    $region38: #{tpu_custom_call.1} parent=1 // pred_check
      _
    $region39: #{tpu_custom_call.1} parent=1 // pred_check_branch
      %88 = sbr.rel (0) target = $region41
    $region40: #{tpu_custom_call.1} parent=1 // pred_region
      %s90 = ssub.s32 16, 16
      %91 = vsyncadd [#allocation12], %s90
      %s93 = sshll.u32 [#allocation11], 4
      %s94 = int_to_ptr.vmem [resolvable:$true] %s93
      %96 = dma.hbm_to_vmem [thread:$0]  %s9, 16, %s94, [#allocation12]
    $region41: #{tpu_custom_call.1} parent=1 // pred_fallthru
      _
    // Predicated region
    $region42: #{tpu_custom_call.1} parent=1 // pred_check
      _
    $region43: #{tpu_custom_call.1} parent=1 // pred_check_branch
      %98 = sbr.rel (0) target = $region45
    $region44: #{tpu_custom_call.1} parent=1 // pred_region
      _
    $region45: #{tpu_custom_call.1} parent=1 // pred_fallthru
      _
    // Predicated region
    $region46: #{tpu_custom_call.1} parent=1 // pred_check
      _
    $region47: #{tpu_custom_call.1} parent=1 // pred_check_branch
      %100 = sbr.rel (0) target = $region49
    $region48: #{tpu_custom_call.1} parent=1 // pred_region
      %101 = dma.done [#allocation3], 256
    $region49: #{tpu_custom_call.1} parent=1 // pred_fallthru
      _
    // Predicated region
    $region50: #{tpu_custom_call.1} parent=1 // pred_check
      _
    $region51: #{tpu_custom_call.1} parent=1 // pred_check_branch
      %103 = sbr.rel (0) target = $region53
    $region52: #{tpu_custom_call.1} parent=1 // pred_region
      %104 = dma.done [#allocation6], 512
    $region53: #{tpu_custom_call.1} parent=1 // pred_fallthru
      _
    // Predicated region
    $region54: #{tpu_custom_call.1} parent=1 // pred_check
      _
    $region55: #{tpu_custom_call.1} parent=1 // pred_check_branch
      %106 = sbr.rel (0) target = $region57
    $region56: #{tpu_custom_call.1} parent=1 // pred_region
      %107 = dma.done [#allocation6], 512
    $region57: #{tpu_custom_call.1} parent=1 // pred_fallthru
      _
    // Predicated region
    $region58: #{tpu_custom_call.1} parent=1 // pred_check
      _
    $region59: #{tpu_custom_call.1} parent=1 // pred_check_branch
      %109 = sbr.rel (0) target = $region61
    $region60: #{tpu_custom_call.1} parent=1 // pred_region
      %110 = dma.done [#allocation9], 384
    $region61: #{tpu_custom_call.1} parent=1 // pred_fallthru
      _
    // Predicated region
    $region62: #{tpu_custom_call.1} parent=1 // pred_check
      _
    $region63: #{tpu_custom_call.1} parent=1 // pred_check_branch
      %112 = sbr.rel (0) target = $region65
    $region64: #{tpu_custom_call.1} parent=1 // pred_region
      %113 = dma.done [#allocation9], 32
    $region65: #{tpu_custom_call.1} parent=1 // pred_fallthru
      _
    // Predicated region
    $region66: #{tpu_custom_call.1} parent=1 // pred_check
      _
    $region67: #{tpu_custom_call.1} parent=1 // pred_check_branch
      %115 = sbr.rel (0) target = $region69
    $region68: #{tpu_custom_call.1} parent=1 // pred_region
      %116 = dma.done [#allocation12], 16
    $region69: #{tpu_custom_call.1} parent=1 // pred_fallthru
      _
    %v118 = vld [vmem:[#allocation2] sm:$0xff]
    %v119 = vld [vmem:[#allocation2 + $0x8] sm:$0xff]
    %v120 = vld [vmem:[#allocation5] sm:$0xff]
    %v121 = vld [vmem:[#allocation5 + $0x8] sm:$0xff]
    %v122 = vld [vmem:[#allocation5 + $0x10] sm:$0xff]
    %v123 = vld [vmem:[#allocation5 + $0x18] sm:$0xff]
    %v124 = vld [vmem:[#allocation8] sm:$0x1]
    %v125 = vld [vmem:[#allocation8 + $0x1] sm:$0x1]
    %vm126 = vcmask 261120
    %v127 = vsel %vm126, %v118, 0.0
    %128 = vadd.xlane.f32.xlu0 %v127
    %v129 = vpop.xlane.xlu0 %128
    %v130 = vsel %vm126, %v119, 0.0
    %131 = vadd.xlane.f32.xlu0 %v130
    %v132 = vpop.xlane.xlu0 %131
    %v133 = vrcp.pop 32.0
    %v134 = vmul.f32 %v129, %v133
    %v135 = vmul.f32 %v132, %v133
    %v136 = vsub.f32 %v118, %v134
    %v137 = vsub.f32 %v119, %v135
    %v138 = vmul.f32 %v136, %v136
    %v139 = vmul.f32 %v137, %v137
    %v140 = vsel %vm126, %v138, 0.0
    %141 = vadd.xlane.f32.xlu0 %v140
    %v142 = vpop.xlane.xlu0 %141
    %v143 = vsel %vm126, %v139, 0.0
    %144 = vadd.xlane.f32.xlu0 %v143
    %v145 = vpop.xlane.xlu0 %144
    %v146 = vmul.f32 %v142, %v133
    %v147 = vmul.f32 %v145, %v133
    %v148 = vadd.f32 %v146, 1e-05
    %v149 = vadd.f32 %v147, 1e-05
    %v150 = vrsqrt.pop %v148
    %v151 = vrsqrt.pop %v149
    %v152 = vmul.f32 %v136, %v150
    %v153 = vmul.f32 %v137, %v151
    %v154 = vlaneseq
    %v155 = vshrl.u32 %v154, 7
    %v156 = vsub.s32 0, %v155
    %v157 = vrot.slane %v124, %v156
    %v158 = vmul.f32 %v152, %v157
    %v159 = vmul.f32 %v153, %v157
    %v160 = vlaneseq
    %v161 = vshrl.u32 %v160, 7
    %v162 = vsub.s32 0, %v161
    %v163 = vrot.slane %v125, %v162
    %v164 = vadd.f32 %v158, %v163
    %v165 = vadd.f32 %v159, %v163
    %v166 = vpack.c.bf16 %v165, %v164
    %v167 = vld [vmem:[%s3] sm:$0xf]
    %v168 = vld [vmem:[%s3 + $0x4] sm:$0xf]
    %v169 = vld [vmem:[%s3 + $0x8] sm:$0xf]
    %v170 = vld [vmem:[%s3 + $0xc] sm:$0xf]
    %v171 = vld [vmem:[#allocation8 + $0x2] sm:$0x1]
    %v172 = vlaneseq
    %v173 = vshrl.u32 %v172, 7
    %v174 = vsub.s32 0, %v173
    %v175 = vrot.slane %v171, %v174
    %v180 = vunpack.c.l.b16 %v167
    %v181 = vunpack.c.l.b16 %v168
    %v182 = vunpack.c.l.b16 %v169
    %v183 = vunpack.c.l.b16 %v170
    %v184 = vpack.c.b16 %v181, %v180
    %v185 = vpack.c.b16 %v183, %v182
    %v189 = vsel %vm126, %v166, 0
    %191 = vmatprep.subr.bf16.mxu0 0
    %192 = vmatpush1.bf16.msra.mxu0 %v184
    %193 = vmatprep.subr.bf16.mxu0 0
    %194 = vmatpush1.bf16.msra.mxu0 %v185
    %195 = vmatprep.subr.bf16.mxu0 0
    %196 = vmatpush1.bf16.msra.mxu0 0
    %197 = vmatprep.subr.bf16.mxu0 0
    %198 = vmatpush1.bf16.msra.mxu0 0
    %199 = vmatprep.subr.bf16.mxu0 0
    %200 = vmatpush1.bf16.msra.mxu0 0
    %201 = vmatprep.subr.bf16.mxu0 0
    %202 = vmatpush1.bf16.msra.mxu0 0
    %203 = vmatprep.subr.bf16.mxu0 0
    %204 = vmatpush1.bf16.msra.mxu0 0
    %205 = vmatprep.subr.bf16.mxu0 0
    %206 = vmatpush1.bf16.msra.mxu0 0
    %207 = vmatprep.subr.bf16.mxu0 0
    %208 = vmatpush1.bf16.msra.mxu0 0
    %209 = vmatprep.subr.bf16.mxu0 0
    %210 = vmatpush1.bf16.msra.mxu0 0
    %211 = vmatprep.subr.bf16.mxu0 0
    %212 = vmatpush1.bf16.msra.mxu0 0
    %213 = vmatprep.subr.bf16.mxu0 0
    %214 = vmatpush1.bf16.msra.mxu0 0
    %215 = vmatprep.subr.bf16.mxu0 0
    %216 = vmatpush1.bf16.msra.mxu0 0
    %217 = vmatprep.subr.bf16.mxu0 0
    %218 = vmatpush1.bf16.msra.mxu0 0
    %219 = vmatprep.subr.bf16.mxu0 0
    %220 = vmatpush1.bf16.msra.mxu0 0
    %221 = vmatprep.subr.bf16.mxu0 0
    %222 = vmatpush1.bf16.msra.mxu0 0
    %223 = vmatprep.mubr.bf16.mxu0 0
    %224 = vmatmul.mubr.bf16.gmra.mrb[0].mxu0 %v189
    %v225 = vpop.f32.mrb[0].mxu0
    %v226 = vadd.f32 %v175, %v225
    %v227 = vpop.f32.mrb[0].mxu0
    %v228 = vpop.f32.mrb[0].mxu0
    %v229 = vadd.f32 %v175, %v228
    %v230 = vpop.f32.mrb[0].mxu0
    %231 = vdwg.mxu0
    %s232 = scalar_lea.vmem %s3, 16
    %v233 = vld [vmem:[%s232] sm:$0xf]
    %v234 = vld [vmem:[%s232 + $0x4] sm:$0xf]
    %v235 = vld [vmem:[%s232 + $0x8] sm:$0xf]
    %v236 = vld [vmem:[%s232 + $0xc] sm:$0xf]
    %v237 = vld [vmem:[#allocation8 + $0x3] sm:$0x1]
    %v238 = vlaneseq
    %v239 = vshrl.u32 %v238, 7
    %v240 = vsub.s32 0, %v239
    %v241 = vrot.slane %v237, %v240
    %v246 = vunpack.c.l.b16 %v233
    %v247 = vunpack.c.l.b16 %v234
    %v248 = vunpack.c.l.b16 %v235
    %v249 = vunpack.c.l.b16 %v236
    %v250 = vpack.c.b16 %v247, %v246
    %v251 = vpack.c.b16 %v249, %v248
    %254 = vmatprep.subr.bf16.mxu0 0
    %255 = vmatpush1.bf16.msra.mxu0 %v250
    %256 = vmatprep.subr.bf16.mxu0 0
    %257 = vmatpush1.bf16.msra.mxu0 %v251
    %258 = vmatprep.subr.bf16.mxu0 0
    %259 = vmatpush1.bf16.msra.mxu0 0
    %260 = vmatprep.subr.bf16.mxu0 0
    %261 = vmatpush1.bf16.msra.mxu0 0
    %262 = vmatprep.subr.bf16.mxu0 0
    %263 = vmatpush1.bf16.msra.mxu0 0
    %264 = vmatprep.subr.bf16.mxu0 0
    %265 = vmatpush1.bf16.msra.mxu0 0
    %266 = vmatprep.subr.bf16.mxu0 0
    %267 = vmatpush1.bf16.msra.mxu0 0
    %268 = vmatprep.subr.bf16.mxu0 0
    %269 = vmatpush1.bf16.msra.mxu0 0
    %270 = vmatprep.subr.bf16.mxu0 0
    %271 = vmatpush1.bf16.msra.mxu0 0
    %272 = vmatprep.subr.bf16.mxu0 0
    %273 = vmatpush1.bf16.msra.mxu0 0
    %274 = vmatprep.subr.bf16.mxu0 0
    %275 = vmatpush1.bf16.msra.mxu0 0
    %276 = vmatprep.subr.bf16.mxu0 0
    %277 = vmatpush1.bf16.msra.mxu0 0
    %278 = vmatprep.subr.bf16.mxu0 0
    %279 = vmatpush1.bf16.msra.mxu0 0
    %280 = vmatprep.subr.bf16.mxu0 0
    %281 = vmatpush1.bf16.msra.mxu0 0
    %282 = vmatprep.subr.bf16.mxu0 0
    %283 = vmatpush1.bf16.msra.mxu0 0
    %284 = vmatprep.subr.bf16.mxu0 0
    %285 = vmatpush1.bf16.msra.mxu0 0
    %286 = vmatprep.mubr.bf16.mxu0 0
    %287 = vmatmul.mubr.bf16.gmra.mrb[0].mxu0 %v189
    %v288 = vpop.f32.mrb[0].mxu0
    %v289 = vadd.f32 %v241, %v288
    %v290 = vpop.f32.mrb[0].mxu0
    %v291 = vpop.f32.mrb[0].mxu0
    %v292 = vadd.f32 %v241, %v291
    %v293 = vpop.f32.mrb[0].mxu0
    %294 = vdwg.mxu0
    %s295 = scalar_lea.vmem %s3, 32
    %v296 = vld [vmem:[%s295] sm:$0xf]
    %v297 = vld [vmem:[%s295 + $0x4] sm:$0xf]
    %v298 = vld [vmem:[%s295 + $0x8] sm:$0xf]
    %v299 = vld [vmem:[%s295 + $0xc] sm:$0xf]
    %v300 = vld [vmem:[#allocation8 + $0x4] sm:$0x1]
    %v301 = vlaneseq
    %v302 = vshrl.u32 %v301, 7
    %v303 = vsub.s32 0, %v302
    %v304 = vrot.slane %v300, %v303
    %v309 = vunpack.c.l.b16 %v296
    %v310 = vunpack.c.l.b16 %v297
    %v311 = vunpack.c.l.b16 %v298
    %v312 = vunpack.c.l.b16 %v299
    %v313 = vpack.c.b16 %v310, %v309
    %v314 = vpack.c.b16 %v312, %v311
    %317 = vmatprep.subr.bf16.mxu0 0
    %318 = vmatpush1.bf16.msra.mxu0 %v313
    %319 = vmatprep.subr.bf16.mxu0 0
    %320 = vmatpush1.bf16.msra.mxu0 %v314
    %321 = vmatprep.subr.bf16.mxu0 0
    %322 = vmatpush1.bf16.msra.mxu0 0
    %323 = vmatprep.subr.bf16.mxu0 0
    %324 = vmatpush1.bf16.msra.mxu0 0
    %325 = vmatprep.subr.bf16.mxu0 0
    %326 = vmatpush1.bf16.msra.mxu0 0
    %327 = vmatprep.subr.bf16.mxu0 0
    %328 = vmatpush1.bf16.msra.mxu0 0
    %329 = vmatprep.subr.bf16.mxu0 0
    %330 = vmatpush1.bf16.msra.mxu0 0
    %331 = vmatprep.subr.bf16.mxu0 0
    %332 = vmatpush1.bf16.msra.mxu0 0
    %333 = vmatprep.subr.bf16.mxu0 0
    %334 = vmatpush1.bf16.msra.mxu0 0
    %335 = vmatprep.subr.bf16.mxu0 0
    %336 = vmatpush1.bf16.msra.mxu0 0
    %337 = vmatprep.subr.bf16.mxu0 0
    %338 = vmatpush1.bf16.msra.mxu0 0
    %339 = vmatprep.subr.bf16.mxu0 0
    %340 = vmatpush1.bf16.msra.mxu0 0
    %341 = vmatprep.subr.bf16.mxu0 0
    %342 = vmatpush1.bf16.msra.mxu0 0
    %343 = vmatprep.subr.bf16.mxu0 0
    %344 = vmatpush1.bf16.msra.mxu0 0
    %345 = vmatprep.subr.bf16.mxu0 0
    %346 = vmatpush1.bf16.msra.mxu0 0
    %347 = vmatprep.subr.bf16.mxu0 0
    %348 = vmatpush1.bf16.msra.mxu0 0
    %349 = vmatprep.mubr.bf16.mxu0 0
    %350 = vmatmul.mubr.bf16.gmra.mrb[0].mxu0 %v189
    %v351 = vpop.f32.mrb[0].mxu0
    %v352 = vadd.f32 %v304, %v351
    %v353 = vpop.f32.mrb[0].mxu0
    %v354 = vpop.f32.mrb[0].mxu0
    %v355 = vadd.f32 %v304, %v354
    %v356 = vpop.f32.mrb[0].mxu0
    %357 = vdwg.mxu0
    %v358 = vmul.f32 %v226, 0.35355338
    %v359 = vmul.f32 %v229, 0.35355338
    %v360 = vmul.f32 %v358, %v120
    %v361 = vmul.f32 %v358, %v121
    %v362 = vmul.f32 %v358, %v122
    %v363 = vmul.f32 %v358, %v123
    %v364 = vpack.c.bf16 %v361, %v360
    %v365 = vpack.c.bf16 %v363, %v362
    %v366 = vpack.c.bf16 %v289, %v289
    %v367 = vld [vmem:[%s1] sm:$0x1]
    %v368 = vlaneseq
    %v369 = vshrl.u32 %v368, 7
    %v370 = vsub.s32 0, %v369
    %v371 = vrot.slane %v367, %v370
    %v373 = vsel %vm126, %v364, 0
    %v376 = vsel %vm126, %v365, 0
    %v379 = vsel %vm126, %v366, 0
    %381 = vmatprep.subr.bf16.mxu0 0
    %382 = vmatpush1.bf16.xpose.msra.mxu0 %v379
    %383 = vmatprep.subr.bf16.mxu0 0
    %384 = vmatpush1.bf16.xpose.msra.mxu0 0
    %385 = vmatprep.subr.bf16.mxu0 0
    %386 = vmatpush1.bf16.xpose.msra.mxu0 0
    %387 = vmatprep.subr.bf16.mxu0 0
    %388 = vmatpush1.bf16.xpose.msra.mxu0 0
    %389 = vmatprep.subr.bf16.mxu0 0
    %390 = vmatpush1.bf16.xpose.msra.mxu0 0
    %391 = vmatprep.subr.bf16.mxu0 0
    %392 = vmatpush1.bf16.xpose.msra.mxu0 0
    %393 = vmatprep.subr.bf16.mxu0 0
    %394 = vmatpush1.bf16.xpose.msra.mxu0 0
    %395 = vmatprep.subr.bf16.mxu0 0
    %396 = vmatpush1.bf16.xpose.msra.mxu0 0
    %397 = vmatprep.subr.bf16.mxu0 0
    %398 = vmatpush1.bf16.xpose.msra.mxu0 0
    %399 = vmatprep.subr.bf16.mxu0 0
    %400 = vmatpush1.bf16.xpose.msra.mxu0 0
    %401 = vmatprep.subr.bf16.mxu0 0
    %402 = vmatpush1.bf16.xpose.msra.mxu0 0
    %403 = vmatprep.subr.bf16.mxu0 0
    %404 = vmatpush1.bf16.xpose.msra.mxu0 0
    %405 = vmatprep.subr.bf16.mxu0 0
    %406 = vmatpush1.bf16.xpose.msra.mxu0 0
    %407 = vmatprep.subr.bf16.mxu0 0
    %408 = vmatpush1.bf16.xpose.msra.mxu0 0
    %409 = vmatprep.subr.bf16.mxu0 0
    %410 = vmatpush1.bf16.xpose.msra.mxu0 0
    %411 = vmatprep.subr.bf16.mxu0 0
    %412 = vmatpush1.bf16.xpose.msra.mxu0 0
    %413 = vmatprep.mubr.bf16.mxu0 0
    %414 = vmatmul.mubr.bf16.gmra.mrb[0].mxu0 %v373
    %v415 = vpop.f32.mrb[0].mxu0
    %v416 = vadd.f32 %v371, %v415
    %v417 = vpop.f32.mrb[0].mxu0
    %v418 = vpop.f32.mrb[0].mxu0
    %v419 = vadd.f32 %v371, %v418
    %v420 = vpop.f32.mrb[0].mxu0
    %421 = vmatprep.mubr.bf16.mxu0 0
    %422 = vmatmul.mubr.bf16.gmra.mrb[0].mxu0 %v376
    %v423 = vpop.f32.mrb[0].mxu0
    %v424 = vadd.f32 %v371, %v423
    %v425 = vpop.f32.mrb[0].mxu0
    %v426 = vpop.f32.mrb[0].mxu0
    %v427 = vadd.f32 %v371, %v426
    %v428 = vpop.f32.mrb[0].mxu0
    %429 = vdwg.mxu0
    %vm430 = vcmask 64512
    %v431 = vsel %vm430, %v416, -inf
    %432 = vmax.xlane.f32.xlu0 %v431
    %v433 = vpop.xlane.xlu0 %432
    %v434 = vsel %vm430, %v419, -inf
    %435 = vmax.xlane.f32.xlu0 %v434
    %v436 = vpop.xlane.xlu0 %435
    %v437 = vsel %vm430, %v424, -inf
    %438 = vmax.xlane.f32.xlu0 %v437
    %v439 = vpop.xlane.xlu0 %438
    %v440 = vsel %vm430, %v427, -inf
    %441 = vmax.xlane.f32.xlu0 %v440
    %v442 = vpop.xlane.xlu0 %441
    %v443 = vsub.f32 %v416, %v433
    %v444 = vsub.f32 %v419, %v436
    %v445 = vsub.f32 %v424, %v439
    %v446 = vsub.f32 %v427, %v442
    %v447 = vmul.f32 %v443, 1.442695
    %v448 = vpow.pop %v447
    %v449 = vmul.f32 %v444, 1.442695
    %v450 = vpow.pop %v449
    %v451 = vmul.f32 %v445, 1.442695
    %v452 = vpow.pop %v451
    %v453 = vmul.f32 %v446, 1.442695
    %v454 = vpow.pop %v453
    %v455 = vsel %vm430, %v448, 0.0
    %456 = vadd.xlane.f32.xlu0 %v455
    %v457 = vpop.xlane.xlu0 %456
    %v458 = vsel %vm430, %v450, 0.0
    %459 = vadd.xlane.f32.xlu0 %v458
    %v460 = vpop.xlane.xlu0 %459
    %v461 = vsel %vm430, %v452, 0.0
    %462 = vadd.xlane.f32.xlu0 %v461
    %v463 = vpop.xlane.xlu0 %462
    %v464 = vsel %vm430, %v454, 0.0
    %465 = vadd.xlane.f32.xlu0 %v464
    %v466 = vpop.xlane.xlu0 %465
    %v467 = vrcp.pop %v457
    %v468 = vrcp.pop %v460
    %v469 = vrcp.pop %v463
    %v470 = vrcp.pop %v466
    %v471 = vmul.f32 %v448, %v467
    %v472 = vmul.f32 %v450, %v468
    %v473 = vmul.f32 %v452, %v469
    %v474 = vmul.f32 %v454, %v470
    %v475 = vpack.c.bf16 %v472, %v471
    %v476 = vpack.c.bf16 %v474, %v473
    %v477 = vpack.c.bf16 %v352, %v352
    %v479 = vsel %vm430, %v475, 0
    %v482 = vsel %vm430, %v476, 0
    %vm484 = vcmask 1043456
    %v486 = vsel %vm484, %v477, 0
    %488 = vmatprep.subr.bf16.mxu0 0
    %489 = vmatpush1.bf16.msra.mxu0 %v486
    %490 = vmatprep.subr.bf16.mxu0 0
    %491 = vmatpush1.bf16.msra.mxu0 0
    %492 = vmatprep.subr.bf16.mxu0 0
    %493 = vmatpush1.bf16.msra.mxu0 0
    %494 = vmatprep.subr.bf16.mxu0 0
    %495 = vmatpush1.bf16.msra.mxu0 0
    %496 = vmatprep.subr.bf16.mxu0 0
    %497 = vmatpush1.bf16.msra.mxu0 0
    %498 = vmatprep.subr.bf16.mxu0 0
    %499 = vmatpush1.bf16.msra.mxu0 0
    %500 = vmatprep.subr.bf16.mxu0 0
    %501 = vmatpush1.bf16.msra.mxu0 0
    %502 = vmatprep.subr.bf16.mxu0 0
    %503 = vmatpush1.bf16.msra.mxu0 0
    %504 = vmatprep.subr.bf16.mxu0 0
    %505 = vmatpush1.bf16.msra.mxu0 0
    %506 = vmatprep.subr.bf16.mxu0 0
    %507 = vmatpush1.bf16.msra.mxu0 0
    %508 = vmatprep.subr.bf16.mxu0 0
    %509 = vmatpush1.bf16.msra.mxu0 0
    %510 = vmatprep.subr.bf16.mxu0 0
    %511 = vmatpush1.bf16.msra.mxu0 0
    %512 = vmatprep.subr.bf16.mxu0 0
    %513 = vmatpush1.bf16.msra.mxu0 0
    %514 = vmatprep.subr.bf16.mxu0 0
    %515 = vmatpush1.bf16.msra.mxu0 0
    %516 = vmatprep.subr.bf16.mxu0 0
    %517 = vmatpush1.bf16.msra.mxu0 0
    %518 = vmatprep.subr.bf16.mxu0 0
    %519 = vmatpush1.bf16.msra.mxu0 0
    %520 = vmatprep.mubr.bf16.mxu0 0
    %521 = vmatmul.mubr.bf16.gmra.mrb[0].mxu0 %v479
    %v522 = vpop.f32.mrb[0].mxu0
    %v523 = vadd.f32 0.0, %v522
    %v524 = vpop.f32.mrb[0].mxu0
    %v525 = vpop.f32.mrb[0].mxu0
    %v526 = vadd.f32 0.0, %v525
    %v527 = vpop.f32.mrb[0].mxu0
    %528 = vmatprep.mubr.bf16.mxu0 0
    %529 = vmatmul.mubr.bf16.gmra.mrb[0].mxu0 %v482
    %v530 = vpop.f32.mrb[0].mxu0
    %v531 = vadd.f32 0.0, %v530
    %v532 = vpop.f32.mrb[0].mxu0
    %v533 = vpop.f32.mrb[0].mxu0
    %v534 = vadd.f32 0.0, %v533
    %v535 = vpop.f32.mrb[0].mxu0
    %536 = vdwg.mxu0
    %v537 = vmul.f32 %v523, %v120
    %v538 = vmul.f32 %v526, %v121
    %v539 = vmul.f32 %v531, %v122
    %v540 = vmul.f32 %v534, %v123
    %v541 = vadd.f32 %v537, %v538
    %v542 = vadd.f32 %v541, %v539
    %v543 = vadd.f32 %v542, %v540
    %v544 = vmul.f32 %v359, %v120
    %v545 = vmul.f32 %v359, %v121
    %v546 = vmul.f32 %v359, %v122
    %v547 = vmul.f32 %v359, %v123
    %v548 = vpack.c.bf16 %v545, %v544
    %v549 = vpack.c.bf16 %v547, %v546
    %v550 = vpack.c.bf16 %v292, %v292
    %v551 = vld [vmem:[%s1 + $0x1] sm:$0x1]
    %v552 = vlaneseq
    %v553 = vshrl.u32 %v552, 7
    %v554 = vsub.s32 0, %v553
    %v555 = vrot.slane %v551, %v554
    %v557 = vsel %vm126, %v548, 0
    %v560 = vsel %vm126, %v549, 0
    %v563 = vsel %vm126, %v550, 0
    %565 = vmatprep.subr.bf16.mxu0 0
    %566 = vmatpush1.bf16.xpose.msra.mxu0 %v563
    %567 = vmatprep.subr.bf16.mxu0 0
    %568 = vmatpush1.bf16.xpose.msra.mxu0 0
    %569 = vmatprep.subr.bf16.mxu0 0
    %570 = vmatpush1.bf16.xpose.msra.mxu0 0
    %571 = vmatprep.subr.bf16.mxu0 0
    %572 = vmatpush1.bf16.xpose.msra.mxu0 0
    %573 = vmatprep.subr.bf16.mxu0 0
    %574 = vmatpush1.bf16.xpose.msra.mxu0 0
    %575 = vmatprep.subr.bf16.mxu0 0
    %576 = vmatpush1.bf16.xpose.msra.mxu0 0
    %577 = vmatprep.subr.bf16.mxu0 0
    %578 = vmatpush1.bf16.xpose.msra.mxu0 0
    %579 = vmatprep.subr.bf16.mxu0 0
    %580 = vmatpush1.bf16.xpose.msra.mxu0 0
    %581 = vmatprep.subr.bf16.mxu0 0
    %582 = vmatpush1.bf16.xpose.msra.mxu0 0
    %583 = vmatprep.subr.bf16.mxu0 0
    %584 = vmatpush1.bf16.xpose.msra.mxu0 0
    %585 = vmatprep.subr.bf16.mxu0 0
    %586 = vmatpush1.bf16.xpose.msra.mxu0 0
    %587 = vmatprep.subr.bf16.mxu0 0
    %588 = vmatpush1.bf16.xpose.msra.mxu0 0
    %589 = vmatprep.subr.bf16.mxu0 0
    %590 = vmatpush1.bf16.xpose.msra.mxu0 0
    %591 = vmatprep.subr.bf16.mxu0 0
    %592 = vmatpush1.bf16.xpose.msra.mxu0 0
    %593 = vmatprep.subr.bf16.mxu0 0
    %594 = vmatpush1.bf16.xpose.msra.mxu0 0
    %595 = vmatprep.subr.bf16.mxu0 0
    %596 = vmatpush1.bf16.xpose.msra.mxu0 0
    %597 = vmatprep.mubr.bf16.mxu0 0
    %598 = vmatmul.mubr.bf16.gmra.mrb[0].mxu0 %v557
    %v599 = vpop.f32.mrb[0].mxu0
    %v600 = vadd.f32 %v555, %v599
    %v601 = vpop.f32.mrb[0].mxu0
    %v602 = vpop.f32.mrb[0].mxu0
    %v603 = vadd.f32 %v555, %v602
    %v604 = vpop.f32.mrb[0].mxu0
    %605 = vmatprep.mubr.bf16.mxu0 0
    %606 = vmatmul.mubr.bf16.gmra.mrb[0].mxu0 %v560
    %v607 = vpop.f32.mrb[0].mxu0
    %v608 = vadd.f32 %v555, %v607
    %v609 = vpop.f32.mrb[0].mxu0
    %v610 = vpop.f32.mrb[0].mxu0
    %v611 = vadd.f32 %v555, %v610
    %v612 = vpop.f32.mrb[0].mxu0
    %613 = vdwg.mxu0
    %v614 = vsel %vm430, %v600, -inf
    %615 = vmax.xlane.f32.xlu0 %v614
    %v616 = vpop.xlane.xlu0 %615
    %v617 = vsel %vm430, %v603, -inf
    %618 = vmax.xlane.f32.xlu0 %v617
    %v619 = vpop.xlane.xlu0 %618
    %v620 = vsel %vm430, %v608, -inf
    %621 = vmax.xlane.f32.xlu0 %v620
    %v622 = vpop.xlane.xlu0 %621
    %v623 = vsel %vm430, %v611, -inf
    %624 = vmax.xlane.f32.xlu0 %v623
    %v625 = vpop.xlane.xlu0 %624
    %v626 = vsub.f32 %v600, %v616
    %v627 = vsub.f32 %v603, %v619
    %v628 = vsub.f32 %v608, %v622
    %v629 = vsub.f32 %v611, %v625
    %v630 = vmul.f32 %v626, 1.442695
    %v631 = vpow.pop %v630
    %v632 = vmul.f32 %v627, 1.442695
    %v633 = vpow.pop %v632
    %v634 = vmul.f32 %v628, 1.442695
    %v635 = vpow.pop %v634
    %v636 = vmul.f32 %v629, 1.442695
    %v637 = vpow.pop %v636
    %v638 = vsel %vm430, %v631, 0.0
    %639 = vadd.xlane.f32.xlu0 %v638
    %v640 = vpop.xlane.xlu0 %639
    %v641 = vsel %vm430, %v633, 0.0
    %642 = vadd.xlane.f32.xlu0 %v641
    %v643 = vpop.xlane.xlu0 %642
    %v644 = vsel %vm430, %v635, 0.0
    %645 = vadd.xlane.f32.xlu0 %v644
    %v646 = vpop.xlane.xlu0 %645
    %v647 = vsel %vm430, %v637, 0.0
    %648 = vadd.xlane.f32.xlu0 %v647
    %v649 = vpop.xlane.xlu0 %648
    %v650 = vrcp.pop %v640
    %v651 = vrcp.pop %v643
    %v652 = vrcp.pop %v646
    %v653 = vrcp.pop %v649
    %v654 = vmul.f32 %v631, %v650
    %v655 = vmul.f32 %v633, %v651
    %v656 = vmul.f32 %v635, %v652
    %v657 = vmul.f32 %v637, %v653
    %v658 = vpack.c.bf16 %v655, %v654
    %v659 = vpack.c.bf16 %v657, %v656
    %v660 = vpack.c.bf16 %v355, %v355
    %v662 = vsel %vm430, %v658, 0
    %v665 = vsel %vm430, %v659, 0
    %v668 = vsel %vm484, %v660, 0
    %670 = vmatprep.subr.bf16.mxu0 0
    %671 = vmatpush1.bf16.msra.mxu0 %v668
    %672 = vmatprep.subr.bf16.mxu0 0
    %673 = vmatpush1.bf16.msra.mxu0 0
    %674 = vmatprep.subr.bf16.mxu0 0
    %675 = vmatpush1.bf16.msra.mxu0 0
    %676 = vmatprep.subr.bf16.mxu0 0
    %677 = vmatpush1.bf16.msra.mxu0 0
    %678 = vmatprep.subr.bf16.mxu0 0
    %679 = vmatpush1.bf16.msra.mxu0 0
    %680 = vmatprep.subr.bf16.mxu0 0
    %681 = vmatpush1.bf16.msra.mxu0 0
    %682 = vmatprep.subr.bf16.mxu0 0
    %683 = vmatpush1.bf16.msra.mxu0 0
    %684 = vmatprep.subr.bf16.mxu0 0
    %685 = vmatpush1.bf16.msra.mxu0 0
    %686 = vmatprep.subr.bf16.mxu0 0
    %687 = vmatpush1.bf16.msra.mxu0 0
    %688 = vmatprep.subr.bf16.mxu0 0
    %689 = vmatpush1.bf16.msra.mxu0 0
    %690 = vmatprep.subr.bf16.mxu0 0
    %691 = vmatpush1.bf16.msra.mxu0 0
    %692 = vmatprep.subr.bf16.mxu0 0
    %693 = vmatpush1.bf16.msra.mxu0 0
    %694 = vmatprep.subr.bf16.mxu0 0
    %695 = vmatpush1.bf16.msra.mxu0 0
    %696 = vmatprep.subr.bf16.mxu0 0
    %697 = vmatpush1.bf16.msra.mxu0 0
    %698 = vmatprep.subr.bf16.mxu0 0
    %699 = vmatpush1.bf16.msra.mxu0 0
    %700 = vmatprep.subr.bf16.mxu0 0
    %701 = vmatpush1.bf16.msra.mxu0 0
    %702 = vmatprep.mubr.bf16.mxu0 0
    %703 = vmatmul.mubr.bf16.gmra.mrb[0].mxu0 %v662
    %v704 = vpop.f32.mrb[0].mxu0
    %v705 = vadd.f32 0.0, %v704
    %v706 = vpop.f32.mrb[0].mxu0
    %v707 = vpop.f32.mrb[0].mxu0
    %v708 = vadd.f32 0.0, %v707
    %v709 = vpop.f32.mrb[0].mxu0
    %710 = vmatprep.mubr.bf16.mxu0 0
    %711 = vmatmul.mubr.bf16.gmra.mrb[0].mxu0 %v665
    %v712 = vpop.f32.mrb[0].mxu0
    %v713 = vadd.f32 0.0, %v712
    %v714 = vpop.f32.mrb[0].mxu0
    %v715 = vpop.f32.mrb[0].mxu0
    %v716 = vadd.f32 0.0, %v715
    %v717 = vpop.f32.mrb[0].mxu0
    %718 = vdwg.mxu0
    %v719 = vmul.f32 %v705, %v120
    %v720 = vmul.f32 %v708, %v121
    %v721 = vmul.f32 %v713, %v122
    %v722 = vmul.f32 %v716, %v123
    %v723 = vadd.f32 %v719, %v720
    %v724 = vadd.f32 %v723, %v721
    %v725 = vadd.f32 %v724, %v722
    %v726 = vpack.c.bf16 %v725, %v543
    %s727 = scalar_lea.vmem %s3, 48
    %v728 = vld [vmem:[%s727] sm:$0xf]
    %v729 = vld [vmem:[%s727 + $0x4] sm:$0xf]
    %v730 = vld [vmem:[%s727 + $0x8] sm:$0xf]
    %v731 = vld [vmem:[%s727 + $0xc] sm:$0xf]
    %v732 = vld [vmem:[#allocation8 + $0x5] sm:$0x1]
    %v733 = vlaneseq
    %v734 = vshrl.u32 %v733, 7
    %v735 = vsub.s32 0, %v734
    %v736 = vrot.slane %v732, %v735
    %v741 = vunpack.c.l.b16 %v728
    %v742 = vunpack.c.l.b16 %v729
    %v743 = vunpack.c.l.b16 %v730
    %v744 = vunpack.c.l.b16 %v731
    %v745 = vpack.c.b16 %v742, %v741
    %v746 = vpack.c.b16 %v744, %v743
    %v750 = vsel %vm126, %v726, 0
    %752 = vmatprep.subr.bf16.mxu0 0
    %753 = vmatpush1.bf16.msra.mxu0 %v745
    %754 = vmatprep.subr.bf16.mxu0 0
    %755 = vmatpush1.bf16.msra.mxu0 %v746
    %756 = vmatprep.subr.bf16.mxu0 0
    %757 = vmatpush1.bf16.msra.mxu0 0
    %758 = vmatprep.subr.bf16.mxu0 0
    %759 = vmatpush1.bf16.msra.mxu0 0
    %760 = vmatprep.subr.bf16.mxu0 0
    %761 = vmatpush1.bf16.msra.mxu0 0
    %762 = vmatprep.subr.bf16.mxu0 0
    %763 = vmatpush1.bf16.msra.mxu0 0
    %764 = vmatprep.subr.bf16.mxu0 0
    %765 = vmatpush1.bf16.msra.mxu0 0
    %766 = vmatprep.subr.bf16.mxu0 0
    %767 = vmatpush1.bf16.msra.mxu0 0
    %768 = vmatprep.subr.bf16.mxu0 0
    %769 = vmatpush1.bf16.msra.mxu0 0
    %770 = vmatprep.subr.bf16.mxu0 0
    %771 = vmatpush1.bf16.msra.mxu0 0
    %772 = vmatprep.subr.bf16.mxu0 0
    %773 = vmatpush1.bf16.msra.mxu0 0
    %774 = vmatprep.subr.bf16.mxu0 0
    %775 = vmatpush1.bf16.msra.mxu0 0
    %776 = vmatprep.subr.bf16.mxu0 0
    %777 = vmatpush1.bf16.msra.mxu0 0
    %778 = vmatprep.subr.bf16.mxu0 0
    %779 = vmatpush1.bf16.msra.mxu0 0
    %780 = vmatprep.subr.bf16.mxu0 0
    %781 = vmatpush1.bf16.msra.mxu0 0
    %782 = vmatprep.subr.bf16.mxu0 0
    %783 = vmatpush1.bf16.msra.mxu0 0
    %784 = vmatprep.mubr.bf16.mxu0 0
    %785 = vmatmul.mubr.bf16.gmra.mrb[0].mxu0 %v750
    %v786 = vpop.f32.mrb[0].mxu0
    %v787 = vadd.f32 %v736, %v786
    %v788 = vpop.f32.mrb[0].mxu0
    %v789 = vpop.f32.mrb[0].mxu0
    %v790 = vadd.f32 %v736, %v789
    %v791 = vpop.f32.mrb[0].mxu0
    %792 = vdwg.mxu0
    %v793 = vadd.f32 %v164, %v787
    %v794 = vadd.f32 %v165, %v790
    %v795 = vld [vmem:[#allocation8 + $0x6] sm:$0x1]
    %v796 = vld [vmem:[#allocation8 + $0x7] sm:$0x1]
    %v797 = vsel %vm126, %v793, 0.0
    %798 = vadd.xlane.f32.xlu0 %v797
    %v799 = vpop.xlane.xlu0 %798
    %v800 = vsel %vm126, %v794, 0.0
    %801 = vadd.xlane.f32.xlu0 %v800
    %v802 = vpop.xlane.xlu0 %801
    %v803 = vmul.f32 %v799, %v133
    %v804 = vmul.f32 %v802, %v133
    %v805 = vsub.f32 %v793, %v803
    %v806 = vsub.f32 %v794, %v804
    %v807 = vmul.f32 %v805, %v805
    %v808 = vmul.f32 %v806, %v806
    %v809 = vsel %vm126, %v807, 0.0
    %810 = vadd.xlane.f32.xlu0 %v809
    %v811 = vpop.xlane.xlu0 %810
    %v812 = vsel %vm126, %v808, 0.0
    %813 = vadd.xlane.f32.xlu0 %v812
    %v814 = vpop.xlane.xlu0 %813
    %v815 = vmul.f32 %v811, %v133
    %v816 = vmul.f32 %v814, %v133
    %v817 = vadd.f32 %v815, 1e-05
    %v818 = vadd.f32 %v816, 1e-05
    %v819 = vrsqrt.pop %v817
    %v820 = vrsqrt.pop %v818
    %v821 = vmul.f32 %v805, %v819
    %v822 = vmul.f32 %v806, %v820
    %v823 = vlaneseq
    %v824 = vshrl.u32 %v823, 7
    %v825 = vsub.s32 0, %v824
    %v826 = vrot.slane %v795, %v825
    %v827 = vmul.f32 %v821, %v826
    %v828 = vmul.f32 %v822, %v826
    %v829 = vlaneseq
    %v830 = vshrl.u32 %v829, 7
    %v831 = vsub.s32 0, %v830
    %v832 = vrot.slane %v796, %v831
    %v833 = vadd.f32 %v827, %v832
    %v834 = vadd.f32 %v828, %v832
    %v835 = vpack.c.bf16 %v834, %v833
    %v836 = vld [vmem:[#allocation7] sm:$0xf]
    %v837 = vld [vmem:[#allocation7 + $0x4] sm:$0xf]
    %v838 = vld [vmem:[#allocation7 + $0x8] sm:$0xf]
    %v839 = vld [vmem:[#allocation7 + $0xc] sm:$0xf]
    %v840 = vld [vmem:[#allocation10] sm:$0x1]
    %v841 = vlaneseq
    %v842 = vshrl.u32 %v841, 7
    %v843 = vsub.s32 0, %v842
    %v844 = vrot.slane %v840, %v843
    %v849 = vunpack.c.l.b16 %v836
    %v850 = vunpack.c.l.b16 %v837
    %v851 = vunpack.c.l.b16 %v838
    %v852 = vunpack.c.l.b16 %v839
    %v853 = vpack.c.b16 %v850, %v849
    %v854 = vpack.c.b16 %v852, %v851
    %v858 = vsel %vm126, %v835, 0
    %860 = vmatprep.subr.bf16.mxu0 0
    %861 = vmatpush1.bf16.msra.mxu0 %v853
    %862 = vmatprep.subr.bf16.mxu0 0
    %863 = vmatpush1.bf16.msra.mxu0 %v854
    %864 = vmatprep.subr.bf16.mxu0 0
    %865 = vmatpush1.bf16.msra.mxu0 0
    %866 = vmatprep.subr.bf16.mxu0 0
    %867 = vmatpush1.bf16.msra.mxu0 0
    %868 = vmatprep.subr.bf16.mxu0 0
    %869 = vmatpush1.bf16.msra.mxu0 0
    %870 = vmatprep.subr.bf16.mxu0 0
    %871 = vmatpush1.bf16.msra.mxu0 0
    %872 = vmatprep.subr.bf16.mxu0 0
    %873 = vmatpush1.bf16.msra.mxu0 0
    %874 = vmatprep.subr.bf16.mxu0 0
    %875 = vmatpush1.bf16.msra.mxu0 0
    %876 = vmatprep.subr.bf16.mxu0 0
    %877 = vmatpush1.bf16.msra.mxu0 0
    %878 = vmatprep.subr.bf16.mxu0 0
    %879 = vmatpush1.bf16.msra.mxu0 0
    %880 = vmatprep.subr.bf16.mxu0 0
    %881 = vmatpush1.bf16.msra.mxu0 0
    %882 = vmatprep.subr.bf16.mxu0 0
    %883 = vmatpush1.bf16.msra.mxu0 0
    %884 = vmatprep.subr.bf16.mxu0 0
    %885 = vmatpush1.bf16.msra.mxu0 0
    %886 = vmatprep.subr.bf16.mxu0 0
    %887 = vmatpush1.bf16.msra.mxu0 0
    %888 = vmatprep.subr.bf16.mxu0 0
    %889 = vmatpush1.bf16.msra.mxu0 0
    %890 = vmatprep.subr.bf16.mxu0 0
    %891 = vmatpush1.bf16.msra.mxu0 0
    %892 = vmatprep.mubr.bf16.mxu0 0
    %893 = vmatmul.mubr.bf16.gmra.mrb[0].mxu0 %v858
    %v894 = vpop.f32.mrb[0].mxu0
    %v895 = vadd.f32 %v844, %v894
    %v896 = vpop.f32.mrb[0].mxu0
    %v897 = vpop.f32.mrb[0].mxu0
    %v898 = vadd.f32 %v844, %v897
    %v899 = vpop.f32.mrb[0].mxu0
    %900 = vdwg.mxu0
    %v901 = vmul.f32 %v895, %v895
    %v902 = vmul.f32 %v898, %v898
    %v903 = vmul.f32 %v895, %v901
    %v904 = vmul.f32 %v898, %v902
    %v905 = vmul.f32 %v903, 0.044715
    %v906 = vmul.f32 %v904, 0.044715
    %v907 = vadd.f32 %v895, %v905
    %v908 = vadd.f32 %v898, %v906
    %v909 = vmul.f32 %v907, 0.7978846
    %v910 = vmul.f32 %v908, 0.7978846
    %v911 = vtanh.pop %v909
    %v912 = vtanh.pop %v910
    %v913 = vadd.f32 %v911, 1.0
    %v914 = vadd.f32 %v912, 1.0
    %v915 = vmul.f32 %v913, 0.5
    %v916 = vmul.f32 %v914, 0.5
    %v917 = vmul.f32 %v895, %v915
    %v918 = vmul.f32 %v898, %v916
    %v919 = vpack.c.bf16 %v918, %v917
    %v920 = vld [vmem:[%s5] sm:$0xf]
    %v921 = vld [vmem:[%s5 + $0x4] sm:$0xf]
    %v922 = vld [vmem:[%s5 + $0x8] sm:$0xf]
    %v923 = vld [vmem:[%s5 + $0xc] sm:$0xf]
    %v924 = vld [vmem:[%s5 + $0x10] sm:$0xf]
    %v925 = vld [vmem:[%s5 + $0x14] sm:$0xf]
    %v926 = vld [vmem:[%s5 + $0x18] sm:$0xf]
    %v927 = vld [vmem:[%s5 + $0x1c] sm:$0xf]
    %v928 = vld [vmem:[#allocation8 + $0x8] sm:$0x1]
    %v929 = vlaneseq
    %v930 = vshrl.u32 %v929, 7
    %v931 = vsub.s32 0, %v930
    %v932 = vrot.slane %v928, %v931
    %v941 = vunpack.c.l.b16 %v920
    %v942 = vunpack.c.l.b16 %v921
    %v943 = vunpack.c.l.b16 %v922
    %v944 = vunpack.c.l.b16 %v923
    %v945 = vunpack.c.l.b16 %v924
    %v946 = vunpack.c.l.b16 %v925
    %v947 = vunpack.c.l.b16 %v926
    %v948 = vunpack.c.l.b16 %v927
    %v949 = vpack.c.b16 %v942, %v941
    %v950 = vpack.c.b16 %v944, %v943
    %v951 = vpack.c.b16 %v946, %v945
    %v952 = vpack.c.b16 %v948, %v947
    %vm957 = vcmask 523264
    %v959 = vsel %vm957, %v919, 0
    %961 = vmatprep.subr.bf16.mxu0 0
    %962 = vmatpush1.bf16.msra.mxu0 %v949
    %963 = vmatprep.subr.bf16.mxu0 0
    %964 = vmatpush1.bf16.msra.mxu0 %v950
    %965 = vmatprep.subr.bf16.mxu0 0
    %966 = vmatpush1.bf16.msra.mxu0 %v951
    %967 = vmatprep.subr.bf16.mxu0 0
    %968 = vmatpush1.bf16.msra.mxu0 %v952
    %969 = vmatprep.subr.bf16.mxu0 0
    %970 = vmatpush1.bf16.msra.mxu0 0
    %971 = vmatprep.subr.bf16.mxu0 0
    %972 = vmatpush1.bf16.msra.mxu0 0
    %973 = vmatprep.subr.bf16.mxu0 0
    %974 = vmatpush1.bf16.msra.mxu0 0
    %975 = vmatprep.subr.bf16.mxu0 0
    %976 = vmatpush1.bf16.msra.mxu0 0
    %977 = vmatprep.subr.bf16.mxu0 0
    %978 = vmatpush1.bf16.msra.mxu0 0
    %979 = vmatprep.subr.bf16.mxu0 0
    %980 = vmatpush1.bf16.msra.mxu0 0
    %981 = vmatprep.subr.bf16.mxu0 0
    %982 = vmatpush1.bf16.msra.mxu0 0
    %983 = vmatprep.subr.bf16.mxu0 0
    %984 = vmatpush1.bf16.msra.mxu0 0
    %985 = vmatprep.subr.bf16.mxu0 0
    %986 = vmatpush1.bf16.msra.mxu0 0
    %987 = vmatprep.subr.bf16.mxu0 0
    %988 = vmatpush1.bf16.msra.mxu0 0
    %989 = vmatprep.subr.bf16.mxu0 0
    %990 = vmatpush1.bf16.msra.mxu0 0
    %991 = vmatprep.subr.bf16.mxu0 0
    %992 = vmatpush1.bf16.msra.mxu0 0
    %993 = vmatprep.mubr.bf16.mxu0 0
    %994 = vmatmul.mubr.bf16.gmra.mrb[0].mxu0 %v959
    %v995 = vpop.f32.mrb[0].mxu0
    %v996 = vadd.f32 %v932, %v995
    %v997 = vpop.f32.mrb[0].mxu0
    %v998 = vpop.f32.mrb[0].mxu0
    %v999 = vadd.f32 %v932, %v998
    %v1000 = vpop.f32.mrb[0].mxu0
    %1001 = vdwg.mxu0
    %v1002 = vadd.f32 %v833, %v996
    %v1003 = vadd.f32 %v834, %v999
    %v1004 = vld [vmem:[#allocation8 + $0x9] sm:$0x1]
    %v1005 = vld [vmem:[#allocation8 + $0xa] sm:$0x1]
    %v1006 = vsel %vm126, %v1002, 0.0
    %1007 = vadd.xlane.f32.xlu0 %v1006
    %v1008 = vpop.xlane.xlu0 %1007
    %v1009 = vsel %vm126, %v1003, 0.0
    %1010 = vadd.xlane.f32.xlu0 %v1009
    %v1011 = vpop.xlane.xlu0 %1010
    %v1012 = vmul.f32 %v1008, %v133
    %v1013 = vmul.f32 %v1011, %v133
    %v1014 = vsub.f32 %v1002, %v1012
    %v1015 = vsub.f32 %v1003, %v1013
    %v1016 = vmul.f32 %v1014, %v1014
    %v1017 = vmul.f32 %v1015, %v1015
    %v1018 = vsel %vm126, %v1016, 0.0
    %1019 = vadd.xlane.f32.xlu0 %v1018
    %v1020 = vpop.xlane.xlu0 %1019
    %v1021 = vsel %vm126, %v1017, 0.0
    %1022 = vadd.xlane.f32.xlu0 %v1021
    %v1023 = vpop.xlane.xlu0 %1022
    %v1024 = vmul.f32 %v1020, %v133
    %v1025 = vmul.f32 %v1023, %v133
    %v1026 = vadd.f32 %v1024, 1e-05
    %v1027 = vadd.f32 %v1025, 1e-05
    %v1028 = vrsqrt.pop %v1026
    %v1029 = vrsqrt.pop %v1027
    %v1030 = vmul.f32 %v1014, %v1028
    %v1031 = vmul.f32 %v1015, %v1029
    %v1032 = vlaneseq
    %v1033 = vshrl.u32 %v1032, 7
    %v1034 = vsub.s32 0, %v1033
    %v1035 = vrot.slane %v1004, %v1034
    %v1036 = vmul.f32 %v1030, %v1035
    %v1037 = vmul.f32 %v1031, %v1035
    %v1038 = vlaneseq
    %v1039 = vshrl.u32 %v1038, 7
    %v1040 = vsub.s32 0, %v1039
    %v1041 = vrot.slane %v1005, %v1040
    %v1042 = vadd.f32 %v1036, %v1041
    %v1043 = vadd.f32 %v1037, %v1041
    %v1044 = vpack.c.bf16 %v1043, %v1042
    %s1045 = scalar_lea.vmem %s3, 64
    %v1046 = vld [vmem:[%s1045] sm:$0xf]
    %v1047 = vld [vmem:[%s1045 + $0x4] sm:$0xf]
    %v1048 = vld [vmem:[%s1045 + $0x8] sm:$0xf]
    %v1049 = vld [vmem:[%s1045 + $0xc] sm:$0xf]
    %v1050 = vld [vmem:[#allocation8 + $0xb] sm:$0x1]
    %v1051 = vlaneseq
    %v1052 = vshrl.u32 %v1051, 7
    %v1053 = vsub.s32 0, %v1052
    %v1054 = vrot.slane %v1050, %v1053
    %v1059 = vunpack.c.l.b16 %v1046
    %v1060 = vunpack.c.l.b16 %v1047
    %v1061 = vunpack.c.l.b16 %v1048
    %v1062 = vunpack.c.l.b16 %v1049
    %v1063 = vpack.c.b16 %v1060, %v1059
    %v1064 = vpack.c.b16 %v1062, %v1061
    %v1068 = vsel %vm126, %v1044, 0
    %1070 = vmatprep.subr.bf16.mxu0 0
    %1071 = vmatpush1.bf16.msra.mxu0 %v1063
    %1072 = vmatprep.subr.bf16.mxu0 0
    %1073 = vmatpush1.bf16.msra.mxu0 %v1064
    %1074 = vmatprep.subr.bf16.mxu0 0
    %1075 = vmatpush1.bf16.msra.mxu0 0
    %1076 = vmatprep.subr.bf16.mxu0 0
    %1077 = vmatpush1.bf16.msra.mxu0 0
    %1078 = vmatprep.subr.bf16.mxu0 0
    %1079 = vmatpush1.bf16.msra.mxu0 0
    %1080 = vmatprep.subr.bf16.mxu0 0
    %1081 = vmatpush1.bf16.msra.mxu0 0
    %1082 = vmatprep.subr.bf16.mxu0 0
    %1083 = vmatpush1.bf16.msra.mxu0 0
    %1084 = vmatprep.subr.bf16.mxu0 0
    %1085 = vmatpush1.bf16.msra.mxu0 0
    %1086 = vmatprep.subr.bf16.mxu0 0
    %1087 = vmatpush1.bf16.msra.mxu0 0
    %1088 = vmatprep.subr.bf16.mxu0 0
    %1089 = vmatpush1.bf16.msra.mxu0 0
    %1090 = vmatprep.subr.bf16.mxu0 0
    %1091 = vmatpush1.bf16.msra.mxu0 0
    %1092 = vmatprep.subr.bf16.mxu0 0
    %1093 = vmatpush1.bf16.msra.mxu0 0
    %1094 = vmatprep.subr.bf16.mxu0 0
    %1095 = vmatpush1.bf16.msra.mxu0 0
    %1096 = vmatprep.subr.bf16.mxu0 0
    %1097 = vmatpush1.bf16.msra.mxu0 0
    %1098 = vmatprep.subr.bf16.mxu0 0
    %1099 = vmatpush1.bf16.msra.mxu0 0
    %1100 = vmatprep.subr.bf16.mxu0 0
    %1101 = vmatpush1.bf16.msra.mxu0 0
    %1102 = vmatprep.mubr.bf16.mxu0 0
    %1103 = vmatmul.mubr.bf16.gmra.mrb[0].mxu0 %v1068
    %v1104 = vpop.f32.mrb[0].mxu0
    %v1105 = vadd.f32 %v1054, %v1104
    %v1106 = vpop.f32.mrb[0].mxu0
    %v1107 = vpop.f32.mrb[0].mxu0
    %v1108 = vadd.f32 %v1054, %v1107
    %v1109 = vpop.f32.mrb[0].mxu0
    %1110 = vdwg.mxu0
    %s1111 = scalar_lea.vmem %s3, 80
    %v1112 = vld [vmem:[%s1111] sm:$0xf]
    %v1113 = vld [vmem:[%s1111 + $0x4] sm:$0xf]
    %v1114 = vld [vmem:[%s1111 + $0x8] sm:$0xf]
    %v1115 = vld [vmem:[%s1111 + $0xc] sm:$0xf]
    %v1116 = vld [vmem:[#allocation8 + $0xc] sm:$0x1]
    %v1117 = vlaneseq
    %v1118 = vshrl.u32 %v1117, 7
    %v1119 = vsub.s32 0, %v1118
    %v1120 = vrot.slane %v1116, %v1119
    %v1125 = vunpack.c.l.b16 %v1112
    %v1126 = vunpack.c.l.b16 %v1113
    %v1127 = vunpack.c.l.b16 %v1114
    %v1128 = vunpack.c.l.b16 %v1115
    %v1129 = vpack.c.b16 %v1126, %v1125
    %v1130 = vpack.c.b16 %v1128, %v1127
    %1133 = vmatprep.subr.bf16.mxu0 0
    %1134 = vmatpush1.bf16.msra.mxu0 %v1129
    %1135 = vmatprep.subr.bf16.mxu0 0
    %1136 = vmatpush1.bf16.msra.mxu0 %v1130
    %1137 = vmatprep.subr.bf16.mxu0 0
    %1138 = vmatpush1.bf16.msra.mxu0 0
    %1139 = vmatprep.subr.bf16.mxu0 0
    %1140 = vmatpush1.bf16.msra.mxu0 0
    %1141 = vmatprep.subr.bf16.mxu0 0
    %1142 = vmatpush1.bf16.msra.mxu0 0
    %1143 = vmatprep.subr.bf16.mxu0 0
    %1144 = vmatpush1.bf16.msra.mxu0 0
    %1145 = vmatprep.subr.bf16.mxu0 0
    %1146 = vmatpush1.bf16.msra.mxu0 0
    %1147 = vmatprep.subr.bf16.mxu0 0
    %1148 = vmatpush1.bf16.msra.mxu0 0
    %1149 = vmatprep.subr.bf16.mxu0 0
    %1150 = vmatpush1.bf16.msra.mxu0 0
    %1151 = vmatprep.subr.bf16.mxu0 0
    %1152 = vmatpush1.bf16.msra.mxu0 0
    %1153 = vmatprep.subr.bf16.mxu0 0
    %1154 = vmatpush1.bf16.msra.mxu0 0
    %1155 = vmatprep.subr.bf16.mxu0 0
    %1156 = vmatpush1.bf16.msra.mxu0 0
    %1157 = vmatprep.subr.bf16.mxu0 0
    %1158 = vmatpush1.bf16.msra.mxu0 0
    %1159 = vmatprep.subr.bf16.mxu0 0
    %1160 = vmatpush1.bf16.msra.mxu0 0
    %1161 = vmatprep.subr.bf16.mxu0 0
    %1162 = vmatpush1.bf16.msra.mxu0 0
    %1163 = vmatprep.subr.bf16.mxu0 0
    %1164 = vmatpush1.bf16.msra.mxu0 0
    %1165 = vmatprep.mubr.bf16.mxu0 0
    %1166 = vmatmul.mubr.bf16.gmra.mrb[0].mxu0 %v1068
    %v1167 = vpop.f32.mrb[0].mxu0
    %v1168 = vadd.f32 %v1120, %v1167
    %v1169 = vpop.f32.mrb[0].mxu0
    %v1170 = vpop.f32.mrb[0].mxu0
    %v1171 = vadd.f32 %v1120, %v1170
    %v1172 = vpop.f32.mrb[0].mxu0
    %1173 = vdwg.mxu0
    %s1174 = scalar_lea.vmem %s3, 96
    %v1175 = vld [vmem:[%s1174] sm:$0xf]
    %v1176 = vld [vmem:[%s1174 + $0x4] sm:$0xf]
    %v1177 = vld [vmem:[%s1174 + $0x8] sm:$0xf]
    %v1178 = vld [vmem:[%s1174 + $0xc] sm:$0xf]
    %v1179 = vld [vmem:[#allocation8 + $0xd] sm:$0x1]
    %v1180 = vlaneseq
    %v1181 = vshrl.u32 %v1180, 7
    %v1182 = vsub.s32 0, %v1181
    %v1183 = vrot.slane %v1179, %v1182
    %v1188 = vunpack.c.l.b16 %v1175
    %v1189 = vunpack.c.l.b16 %v1176
    %v1190 = vunpack.c.l.b16 %v1177
    %v1191 = vunpack.c.l.b16 %v1178
    %v1192 = vpack.c.b16 %v1189, %v1188
    %v1193 = vpack.c.b16 %v1191, %v1190
    %1196 = vmatprep.subr.bf16.mxu0 0
    %1197 = vmatpush1.bf16.msra.mxu0 %v1192
    %1198 = vmatprep.subr.bf16.mxu0 0
    %1199 = vmatpush1.bf16.msra.mxu0 %v1193
    %1200 = vmatprep.subr.bf16.mxu0 0
    %1201 = vmatpush1.bf16.msra.mxu0 0
    %1202 = vmatprep.subr.bf16.mxu0 0
    %1203 = vmatpush1.bf16.msra.mxu0 0
    %1204 = vmatprep.subr.bf16.mxu0 0
    %1205 = vmatpush1.bf16.msra.mxu0 0
    %1206 = vmatprep.subr.bf16.mxu0 0
    %1207 = vmatpush1.bf16.msra.mxu0 0
    %1208 = vmatprep.subr.bf16.mxu0 0
    %1209 = vmatpush1.bf16.msra.mxu0 0
    %1210 = vmatprep.subr.bf16.mxu0 0
    %1211 = vmatpush1.bf16.msra.mxu0 0
    %1212 = vmatprep.subr.bf16.mxu0 0
    %1213 = vmatpush1.bf16.msra.mxu0 0
    %1214 = vmatprep.subr.bf16.mxu0 0
    %1215 = vmatpush1.bf16.msra.mxu0 0
    %1216 = vmatprep.subr.bf16.mxu0 0
    %1217 = vmatpush1.bf16.msra.mxu0 0
    %1218 = vmatprep.subr.bf16.mxu0 0
    %1219 = vmatpush1.bf16.msra.mxu0 0
    %1220 = vmatprep.subr.bf16.mxu0 0
    %1221 = vmatpush1.bf16.msra.mxu0 0
    %1222 = vmatprep.subr.bf16.mxu0 0
    %1223 = vmatpush1.bf16.msra.mxu0 0
    %1224 = vmatprep.subr.bf16.mxu0 0
    %1225 = vmatpush1.bf16.msra.mxu0 0
    %1226 = vmatprep.subr.bf16.mxu0 0
    %1227 = vmatpush1.bf16.msra.mxu0 0
    %1228 = vmatprep.mubr.bf16.mxu0 0
    %1229 = vmatmul.mubr.bf16.gmra.mrb[0].mxu0 %v1068
    %v1230 = vpop.f32.mrb[0].mxu0
    %v1231 = vadd.f32 %v1183, %v1230
    %v1232 = vpop.f32.mrb[0].mxu0
    %v1233 = vpop.f32.mrb[0].mxu0
    %v1234 = vadd.f32 %v1183, %v1233
    %v1235 = vpop.f32.mrb[0].mxu0
    %1236 = vdwg.mxu0
    %v1237 = vmul.f32 %v1105, 0.35355338
    %v1238 = vmul.f32 %v1108, 0.35355338
    %v1239 = vmul.f32 %v1237, %v120
    %v1240 = vmul.f32 %v1237, %v121
    %v1241 = vmul.f32 %v1237, %v122
    %v1242 = vmul.f32 %v1237, %v123
    %v1243 = vpack.c.bf16 %v1240, %v1239
    %v1244 = vpack.c.bf16 %v1242, %v1241
    %v1245 = vpack.c.bf16 %v1168, %v1168
    %v1247 = vsel %vm126, %v1243, 0
    %v1250 = vsel %vm126, %v1244, 0
    %v1253 = vsel %vm126, %v1245, 0
    %1255 = vmatprep.subr.bf16.mxu0 0
    %1256 = vmatpush1.bf16.xpose.msra.mxu0 %v1253
    %1257 = vmatprep.subr.bf16.mxu0 0
    %1258 = vmatpush1.bf16.xpose.msra.mxu0 0
    %1259 = vmatprep.subr.bf16.mxu0 0
    %1260 = vmatpush1.bf16.xpose.msra.mxu0 0
    %1261 = vmatprep.subr.bf16.mxu0 0
    %1262 = vmatpush1.bf16.xpose.msra.mxu0 0
    %1263 = vmatprep.subr.bf16.mxu0 0
    %1264 = vmatpush1.bf16.xpose.msra.mxu0 0
    %1265 = vmatprep.subr.bf16.mxu0 0
    %1266 = vmatpush1.bf16.xpose.msra.mxu0 0
    %1267 = vmatprep.subr.bf16.mxu0 0
    %1268 = vmatpush1.bf16.xpose.msra.mxu0 0
    %1269 = vmatprep.subr.bf16.mxu0 0
    %1270 = vmatpush1.bf16.xpose.msra.mxu0 0
    %1271 = vmatprep.subr.bf16.mxu0 0
    %1272 = vmatpush1.bf16.xpose.msra.mxu0 0
    %1273 = vmatprep.subr.bf16.mxu0 0
    %1274 = vmatpush1.bf16.xpose.msra.mxu0 0
    %1275 = vmatprep.subr.bf16.mxu0 0
    %1276 = vmatpush1.bf16.xpose.msra.mxu0 0
    %1277 = vmatprep.subr.bf16.mxu0 0
    %1278 = vmatpush1.bf16.xpose.msra.mxu0 0
    %1279 = vmatprep.subr.bf16.mxu0 0
    %1280 = vmatpush1.bf16.xpose.msra.mxu0 0
    %1281 = vmatprep.subr.bf16.mxu0 0
    %1282 = vmatpush1.bf16.xpose.msra.mxu0 0
    %1283 = vmatprep.subr.bf16.mxu0 0
    %1284 = vmatpush1.bf16.xpose.msra.mxu0 0
    %1285 = vmatprep.subr.bf16.mxu0 0
    %1286 = vmatpush1.bf16.xpose.msra.mxu0 0
    %1287 = vmatprep.mubr.bf16.mxu0 0
    %1288 = vmatmul.mubr.bf16.gmra.mrb[0].mxu0 %v1247
    %v1289 = vpop.f32.mrb[0].mxu0
    %v1290 = vadd.f32 %v371, %v1289
    %v1291 = vpop.f32.mrb[0].mxu0
    %v1292 = vpop.f32.mrb[0].mxu0
    %v1293 = vadd.f32 %v371, %v1292
    %v1294 = vpop.f32.mrb[0].mxu0
    %1295 = vmatprep.mubr.bf16.mxu0 0
    %1296 = vmatmul.mubr.bf16.gmra.mrb[0].mxu0 %v1250
    %v1297 = vpop.f32.mrb[0].mxu0
    %v1298 = vadd.f32 %v371, %v1297
    %v1299 = vpop.f32.mrb[0].mxu0
    %v1300 = vpop.f32.mrb[0].mxu0
    %v1301 = vadd.f32 %v371, %v1300
    %v1302 = vpop.f32.mrb[0].mxu0
    %1303 = vdwg.mxu0
    %v1304 = vsel %vm430, %v1290, -inf
    %1305 = vmax.xlane.f32.xlu0 %v1304
    %v1306 = vpop.xlane.xlu0 %1305
    %v1307 = vsel %vm430, %v1293, -inf
    %1308 = vmax.xlane.f32.xlu0 %v1307
    %v1309 = vpop.xlane.xlu0 %1308
    %v1310 = vsel %vm430, %v1298, -inf
    %1311 = vmax.xlane.f32.xlu0 %v1310
    %v1312 = vpop.xlane.xlu0 %1311
    %v1313 = vsel %vm430, %v1301, -inf
    %1314 = vmax.xlane.f32.xlu0 %v1313
    %v1315 = vpop.xlane.xlu0 %1314
    %v1316 = vsub.f32 %v1290, %v1306
    %v1317 = vsub.f32 %v1293, %v1309
    %v1318 = vsub.f32 %v1298, %v1312
    %v1319 = vsub.f32 %v1301, %v1315
    %v1320 = vmul.f32 %v1316, 1.442695
    %v1321 = vpow.pop %v1320
    %v1322 = vmul.f32 %v1317, 1.442695
    %v1323 = vpow.pop %v1322
    %v1324 = vmul.f32 %v1318, 1.442695
    %v1325 = vpow.pop %v1324
    %v1326 = vmul.f32 %v1319, 1.442695
    %v1327 = vpow.pop %v1326
    %v1328 = vsel %vm430, %v1321, 0.0
    %1329 = vadd.xlane.f32.xlu0 %v1328
    %v1330 = vpop.xlane.xlu0 %1329
    %v1331 = vsel %vm430, %v1323, 0.0
    %1332 = vadd.xlane.f32.xlu0 %v1331
    %v1333 = vpop.xlane.xlu0 %1332
    %v1334 = vsel %vm430, %v1325, 0.0
    %1335 = vadd.xlane.f32.xlu0 %v1334
    %v1336 = vpop.xlane.xlu0 %1335
    %v1337 = vsel %vm430, %v1327, 0.0
    %1338 = vadd.xlane.f32.xlu0 %v1337
    %v1339 = vpop.xlane.xlu0 %1338
    %v1340 = vrcp.pop %v1330
    %v1341 = vrcp.pop %v1333
    %v1342 = vrcp.pop %v1336
    %v1343 = vrcp.pop %v1339
    %v1344 = vmul.f32 %v1321, %v1340
    %v1345 = vmul.f32 %v1323, %v1341
    %v1346 = vmul.f32 %v1325, %v1342
    %v1347 = vmul.f32 %v1327, %v1343
    %v1348 = vpack.c.bf16 %v1345, %v1344
    %v1349 = vpack.c.bf16 %v1347, %v1346
    %v1350 = vpack.c.bf16 %v1231, %v1231
    %v1352 = vsel %vm430, %v1348, 0
    %v1355 = vsel %vm430, %v1349, 0
    %v1358 = vsel %vm484, %v1350, 0
    %1360 = vmatprep.subr.bf16.mxu0 0
    %1361 = vmatpush1.bf16.msra.mxu0 %v1358
    %1362 = vmatprep.subr.bf16.mxu0 0
    %1363 = vmatpush1.bf16.msra.mxu0 0
    %1364 = vmatprep.subr.bf16.mxu0 0
    %1365 = vmatpush1.bf16.msra.mxu0 0
    %1366 = vmatprep.subr.bf16.mxu0 0
    %1367 = vmatpush1.bf16.msra.mxu0 0
    %1368 = vmatprep.subr.bf16.mxu0 0
    %1369 = vmatpush1.bf16.msra.mxu0 0
    %1370 = vmatprep.subr.bf16.mxu0 0
    %1371 = vmatpush1.bf16.msra.mxu0 0
    %1372 = vmatprep.subr.bf16.mxu0 0
    %1373 = vmatpush1.bf16.msra.mxu0 0
    %1374 = vmatprep.subr.bf16.mxu0 0
    %1375 = vmatpush1.bf16.msra.mxu0 0
    %1376 = vmatprep.subr.bf16.mxu0 0
    %1377 = vmatpush1.bf16.msra.mxu0 0
    %1378 = vmatprep.subr.bf16.mxu0 0
    %1379 = vmatpush1.bf16.msra.mxu0 0
    %1380 = vmatprep.subr.bf16.mxu0 0
    %1381 = vmatpush1.bf16.msra.mxu0 0
    %1382 = vmatprep.subr.bf16.mxu0 0
    %1383 = vmatpush1.bf16.msra.mxu0 0
    %1384 = vmatprep.subr.bf16.mxu0 0
    %1385 = vmatpush1.bf16.msra.mxu0 0
    %1386 = vmatprep.subr.bf16.mxu0 0
    %1387 = vmatpush1.bf16.msra.mxu0 0
    %1388 = vmatprep.subr.bf16.mxu0 0
    %1389 = vmatpush1.bf16.msra.mxu0 0
    %1390 = vmatprep.subr.bf16.mxu0 0
    %1391 = vmatpush1.bf16.msra.mxu0 0
    %1392 = vmatprep.mubr.bf16.mxu0 0
    %1393 = vmatmul.mubr.bf16.gmra.mrb[0].mxu0 %v1352
    %v1394 = vpop.f32.mrb[0].mxu0
    %v1395 = vadd.f32 0.0, %v1394
    %v1396 = vpop.f32.mrb[0].mxu0
    %v1397 = vpop.f32.mrb[0].mxu0
    %v1398 = vadd.f32 0.0, %v1397
    %v1399 = vpop.f32.mrb[0].mxu0
    %1400 = vmatprep.mubr.bf16.mxu0 0
    %1401 = vmatmul.mubr.bf16.gmra.mrb[0].mxu0 %v1355
    %v1402 = vpop.f32.mrb[0].mxu0
    %v1403 = vadd.f32 0.0, %v1402
    %v1404 = vpop.f32.mrb[0].mxu0
    %v1405 = vpop.f32.mrb[0].mxu0
    %v1406 = vadd.f32 0.0, %v1405
    %v1407 = vpop.f32.mrb[0].mxu0
    %1408 = vdwg.mxu0
    %v1409 = vmul.f32 %v1395, %v120
    %v1410 = vmul.f32 %v1398, %v121
    %v1411 = vmul.f32 %v1403, %v122
    %v1412 = vmul.f32 %v1406, %v123
    %v1413 = vadd.f32 %v1409, %v1410
    %v1414 = vadd.f32 %v1413, %v1411
    %v1415 = vadd.f32 %v1414, %v1412
    %v1416 = vmul.f32 %v1238, %v120
    %v1417 = vmul.f32 %v1238, %v121
    %v1418 = vmul.f32 %v1238, %v122
    %v1419 = vmul.f32 %v1238, %v123
    %v1420 = vpack.c.bf16 %v1417, %v1416
    %v1421 = vpack.c.bf16 %v1419, %v1418
    %v1422 = vpack.c.bf16 %v1171, %v1171
    %v1424 = vsel %vm126, %v1420, 0
    %v1427 = vsel %vm126, %v1421, 0
    %v1430 = vsel %vm126, %v1422, 0
    %1432 = vmatprep.subr.bf16.mxu0 0
    %1433 = vmatpush1.bf16.xpose.msra.mxu0 %v1430
    %1434 = vmatprep.subr.bf16.mxu0 0
    %1435 = vmatpush1.bf16.xpose.msra.mxu0 0
    %1436 = vmatprep.subr.bf16.mxu0 0
    %1437 = vmatpush1.bf16.xpose.msra.mxu0 0
    %1438 = vmatprep.subr.bf16.mxu0 0
    %1439 = vmatpush1.bf16.xpose.msra.mxu0 0
    %1440 = vmatprep.subr.bf16.mxu0 0
    %1441 = vmatpush1.bf16.xpose.msra.mxu0 0
    %1442 = vmatprep.subr.bf16.mxu0 0
    %1443 = vmatpush1.bf16.xpose.msra.mxu0 0
    %1444 = vmatprep.subr.bf16.mxu0 0
    %1445 = vmatpush1.bf16.xpose.msra.mxu0 0
    %1446 = vmatprep.subr.bf16.mxu0 0
    %1447 = vmatpush1.bf16.xpose.msra.mxu0 0
    %1448 = vmatprep.subr.bf16.mxu0 0
    %1449 = vmatpush1.bf16.xpose.msra.mxu0 0
    %1450 = vmatprep.subr.bf16.mxu0 0
    %1451 = vmatpush1.bf16.xpose.msra.mxu0 0
    %1452 = vmatprep.subr.bf16.mxu0 0
    %1453 = vmatpush1.bf16.xpose.msra.mxu0 0
    %1454 = vmatprep.subr.bf16.mxu0 0
    %1455 = vmatpush1.bf16.xpose.msra.mxu0 0
    %1456 = vmatprep.subr.bf16.mxu0 0
    %1457 = vmatpush1.bf16.xpose.msra.mxu0 0
    %1458 = vmatprep.subr.bf16.mxu0 0
    %1459 = vmatpush1.bf16.xpose.msra.mxu0 0
    %1460 = vmatprep.subr.bf16.mxu0 0
    %1461 = vmatpush1.bf16.xpose.msra.mxu0 0
    %1462 = vmatprep.subr.bf16.mxu0 0
    %1463 = vmatpush1.bf16.xpose.msra.mxu0 0
    %1464 = vmatprep.mubr.bf16.mxu0 0
    %1465 = vmatmul.mubr.bf16.gmra.mrb[0].mxu0 %v1424
    %v1466 = vpop.f32.mrb[0].mxu0
    %v1467 = vadd.f32 %v555, %v1466
    %v1468 = vpop.f32.mrb[0].mxu0
    %v1469 = vpop.f32.mrb[0].mxu0
    %v1470 = vadd.f32 %v555, %v1469
    %v1471 = vpop.f32.mrb[0].mxu0
    %1472 = vmatprep.mubr.bf16.mxu0 0
    %1473 = vmatmul.mubr.bf16.gmra.mrb[0].mxu0 %v1427
    %v1474 = vpop.f32.mrb[0].mxu0
    %v1475 = vadd.f32 %v555, %v1474
    %v1476 = vpop.f32.mrb[0].mxu0
    %v1477 = vpop.f32.mrb[0].mxu0
    %v1478 = vadd.f32 %v555, %v1477
    %v1479 = vpop.f32.mrb[0].mxu0
    %1480 = vdwg.mxu0
    %v1481 = vsel %vm430, %v1467, -inf
    %1482 = vmax.xlane.f32.xlu0 %v1481
    %v1483 = vpop.xlane.xlu0 %1482
    %v1484 = vsel %vm430, %v1470, -inf
    %1485 = vmax.xlane.f32.xlu0 %v1484
    %v1486 = vpop.xlane.xlu0 %1485
    %v1487 = vsel %vm430, %v1475, -inf
    %1488 = vmax.xlane.f32.xlu0 %v1487
    %v1489 = vpop.xlane.xlu0 %1488
    %v1490 = vsel %vm430, %v1478, -inf
    %1491 = vmax.xlane.f32.xlu0 %v1490
    %v1492 = vpop.xlane.xlu0 %1491
    %v1493 = vsub.f32 %v1467, %v1483
    %v1494 = vsub.f32 %v1470, %v1486
    %v1495 = vsub.f32 %v1475, %v1489
    %v1496 = vsub.f32 %v1478, %v1492
    %v1497 = vmul.f32 %v1493, 1.442695
    %v1498 = vpow.pop %v1497
    %v1499 = vmul.f32 %v1494, 1.442695
    %v1500 = vpow.pop %v1499
    %v1501 = vmul.f32 %v1495, 1.442695
    %v1502 = vpow.pop %v1501
    %v1503 = vmul.f32 %v1496, 1.442695
    %v1504 = vpow.pop %v1503
    %v1505 = vsel %vm430, %v1498, 0.0
    %1506 = vadd.xlane.f32.xlu0 %v1505
    %v1507 = vpop.xlane.xlu0 %1506
    %v1508 = vsel %vm430, %v1500, 0.0
    %1509 = vadd.xlane.f32.xlu0 %v1508
    %v1510 = vpop.xlane.xlu0 %1509
    %v1511 = vsel %vm430, %v1502, 0.0
    %1512 = vadd.xlane.f32.xlu0 %v1511
    %v1513 = vpop.xlane.xlu0 %1512
    %v1514 = vsel %vm430, %v1504, 0.0
    %1515 = vadd.xlane.f32.xlu0 %v1514
    %v1516 = vpop.xlane.xlu0 %1515
    %v1517 = vrcp.pop %v1507
    %v1518 = vrcp.pop %v1510
    %v1519 = vrcp.pop %v1513
    %v1520 = vrcp.pop %v1516
    %v1521 = vmul.f32 %v1498, %v1517
    %v1522 = vmul.f32 %v1500, %v1518
    %v1523 = vmul.f32 %v1502, %v1519
    %v1524 = vmul.f32 %v1504, %v1520
    %v1525 = vpack.c.bf16 %v1522, %v1521
    %v1526 = vpack.c.bf16 %v1524, %v1523
    %v1527 = vpack.c.bf16 %v1234, %v1234
    %v1529 = vsel %vm430, %v1525, 0
    %v1532 = vsel %vm430, %v1526, 0
    %v1535 = vsel %vm484, %v1527, 0
    %1537 = vmatprep.subr.bf16.mxu0 0
    %1538 = vmatpush1.bf16.msra.mxu0 %v1535
    %1539 = vmatprep.subr.bf16.mxu0 0
    %1540 = vmatpush1.bf16.msra.mxu0 0
    %1541 = vmatprep.subr.bf16.mxu0 0
    %1542 = vmatpush1.bf16.msra.mxu0 0
    %1543 = vmatprep.subr.bf16.mxu0 0
    %1544 = vmatpush1.bf16.msra.mxu0 0
    %1545 = vmatprep.subr.bf16.mxu0 0
    %1546 = vmatpush1.bf16.msra.mxu0 0
    %1547 = vmatprep.subr.bf16.mxu0 0
    %1548 = vmatpush1.bf16.msra.mxu0 0
    %1549 = vmatprep.subr.bf16.mxu0 0
    %1550 = vmatpush1.bf16.msra.mxu0 0
    %1551 = vmatprep.subr.bf16.mxu0 0
    %1552 = vmatpush1.bf16.msra.mxu0 0
    %1553 = vmatprep.subr.bf16.mxu0 0
    %1554 = vmatpush1.bf16.msra.mxu0 0
    %1555 = vmatprep.subr.bf16.mxu0 0
    %1556 = vmatpush1.bf16.msra.mxu0 0
    %1557 = vmatprep.subr.bf16.mxu0 0
    %1558 = vmatpush1.bf16.msra.mxu0 0
    %1559 = vmatprep.subr.bf16.mxu0 0
    %1560 = vmatpush1.bf16.msra.mxu0 0
    %1561 = vmatprep.subr.bf16.mxu0 0
    %1562 = vmatpush1.bf16.msra.mxu0 0
    %1563 = vmatprep.subr.bf16.mxu0 0
    %1564 = vmatpush1.bf16.msra.mxu0 0
    %1565 = vmatprep.subr.bf16.mxu0 0
    %1566 = vmatpush1.bf16.msra.mxu0 0
    %1567 = vmatprep.subr.bf16.mxu0 0
    %1568 = vmatpush1.bf16.msra.mxu0 0
    %1569 = vmatprep.mubr.bf16.mxu0 0
    %1570 = vmatmul.mubr.bf16.gmra.mrb[0].mxu0 %v1529
    %v1571 = vpop.f32.mrb[0].mxu0
    %v1572 = vadd.f32 0.0, %v1571
    %v1573 = vpop.f32.mrb[0].mxu0
    %v1574 = vpop.f32.mrb[0].mxu0
    %v1575 = vadd.f32 0.0, %v1574
    %v1576 = vpop.f32.mrb[0].mxu0
    %1577 = vmatprep.mubr.bf16.mxu0 0
    %1578 = vmatmul.mubr.bf16.gmra.mrb[0].mxu0 %v1532
    %v1579 = vpop.f32.mrb[0].mxu0
    %v1580 = vadd.f32 0.0, %v1579
    %v1581 = vpop.f32.mrb[0].mxu0
    %v1582 = vpop.f32.mrb[0].mxu0
    %v1583 = vadd.f32 0.0, %v1582
    %v1584 = vpop.f32.mrb[0].mxu0
    %1585 = vdwg.mxu0
    %v1586 = vmul.f32 %v1572, %v120
    %v1587 = vmul.f32 %v1575, %v121
    %v1588 = vmul.f32 %v1580, %v122
    %v1589 = vmul.f32 %v1583, %v123
    %v1590 = vadd.f32 %v1586, %v1587
    %v1591 = vadd.f32 %v1590, %v1588
    %v1592 = vadd.f32 %v1591, %v1589
    %v1593 = vpack.c.bf16 %v1592, %v1415
    %s1594 = scalar_lea.vmem %s3, 112
    %v1595 = vld [vmem:[%s1594] sm:$0xf]
    %v1596 = vld [vmem:[%s1594 + $0x4] sm:$0xf]
    %v1597 = vld [vmem:[%s1594 + $0x8] sm:$0xf]
    %v1598 = vld [vmem:[%s1594 + $0xc] sm:$0xf]
    %v1599 = vld [vmem:[#allocation8 + $0xe] sm:$0x1]
    %v1600 = vlaneseq
    %v1601 = vshrl.u32 %v1600, 7
    %v1602 = vsub.s32 0, %v1601
    %v1603 = vrot.slane %v1599, %v1602
    %v1608 = vunpack.c.l.b16 %v1595
    %v1609 = vunpack.c.l.b16 %v1596
    %v1610 = vunpack.c.l.b16 %v1597
    %v1611 = vunpack.c.l.b16 %v1598
    %v1612 = vpack.c.b16 %v1609, %v1608
    %v1613 = vpack.c.b16 %v1611, %v1610
    %v1617 = vsel %vm126, %v1593, 0
    %1619 = vmatprep.subr.bf16.mxu0 0
    %1620 = vmatpush1.bf16.msra.mxu0 %v1612
    %1621 = vmatprep.subr.bf16.mxu0 0
    %1622 = vmatpush1.bf16.msra.mxu0 %v1613
    %1623 = vmatprep.subr.bf16.mxu0 0
    %1624 = vmatpush1.bf16.msra.mxu0 0
    %1625 = vmatprep.subr.bf16.mxu0 0
    %1626 = vmatpush1.bf16.msra.mxu0 0
    %1627 = vmatprep.subr.bf16.mxu0 0
    %1628 = vmatpush1.bf16.msra.mxu0 0
    %1629 = vmatprep.subr.bf16.mxu0 0
    %1630 = vmatpush1.bf16.msra.mxu0 0
    %1631 = vmatprep.subr.bf16.mxu0 0
    %1632 = vmatpush1.bf16.msra.mxu0 0
    %1633 = vmatprep.subr.bf16.mxu0 0
    %1634 = vmatpush1.bf16.msra.mxu0 0
    %1635 = vmatprep.subr.bf16.mxu0 0
    %1636 = vmatpush1.bf16.msra.mxu0 0
    %1637 = vmatprep.subr.bf16.mxu0 0
    %1638 = vmatpush1.bf16.msra.mxu0 0
    %1639 = vmatprep.subr.bf16.mxu0 0
    %1640 = vmatpush1.bf16.msra.mxu0 0
    %1641 = vmatprep.subr.bf16.mxu0 0
    %1642 = vmatpush1.bf16.msra.mxu0 0
    %1643 = vmatprep.subr.bf16.mxu0 0
    %1644 = vmatpush1.bf16.msra.mxu0 0
    %1645 = vmatprep.subr.bf16.mxu0 0
    %1646 = vmatpush1.bf16.msra.mxu0 0
    %1647 = vmatprep.subr.bf16.mxu0 0
    %1648 = vmatpush1.bf16.msra.mxu0 0
    %1649 = vmatprep.subr.bf16.mxu0 0
    %1650 = vmatpush1.bf16.msra.mxu0 0
    %1651 = vmatprep.mubr.bf16.mxu0 0
    %1652 = vmatmul.mubr.bf16.gmra.mrb[0].mxu0 %v1617
    %v1653 = vpop.f32.mrb[0].mxu0
    %v1654 = vadd.f32 %v1603, %v1653
    %v1655 = vpop.f32.mrb[0].mxu0
    %v1656 = vpop.f32.mrb[0].mxu0
    %v1657 = vadd.f32 %v1603, %v1656
    %v1658 = vpop.f32.mrb[0].mxu0
    %1659 = vdwg.mxu0
    %v1660 = vadd.f32 %v1042, %v1654
    %v1661 = vadd.f32 %v1043, %v1657
    %v1662 = vld [vmem:[#allocation8 + $0xf] sm:$0x1]
    %v1663 = vld [vmem:[#allocation8 + $0x10] sm:$0x1]
    %v1664 = vsel %vm126, %v1660, 0.0
    %1665 = vadd.xlane.f32.xlu0 %v1664
    %v1666 = vpop.xlane.xlu0 %1665
    %v1667 = vsel %vm126, %v1661, 0.0
    %1668 = vadd.xlane.f32.xlu0 %v1667
    %v1669 = vpop.xlane.xlu0 %1668
    %v1670 = vmul.f32 %v1666, %v133
    %v1671 = vmul.f32 %v1669, %v133
    %v1672 = vsub.f32 %v1660, %v1670
    %v1673 = vsub.f32 %v1661, %v1671
    %v1674 = vmul.f32 %v1672, %v1672
    %v1675 = vmul.f32 %v1673, %v1673
    %v1676 = vsel %vm126, %v1674, 0.0
    %1677 = vadd.xlane.f32.xlu0 %v1676
    %v1678 = vpop.xlane.xlu0 %1677
    %v1679 = vsel %vm126, %v1675, 0.0
    %1680 = vadd.xlane.f32.xlu0 %v1679
    %v1681 = vpop.xlane.xlu0 %1680
    %v1682 = vmul.f32 %v1678, %v133
    %v1683 = vmul.f32 %v1681, %v133
    %v1684 = vadd.f32 %v1682, 1e-05
    %v1685 = vadd.f32 %v1683, 1e-05
    %v1686 = vrsqrt.pop %v1684
    %v1687 = vrsqrt.pop %v1685
    %v1688 = vmul.f32 %v1672, %v1686
    %v1689 = vmul.f32 %v1673, %v1687
    %v1690 = vlaneseq
    %v1691 = vshrl.u32 %v1690, 7
    %v1692 = vsub.s32 0, %v1691
    %v1693 = vrot.slane %v1662, %v1692
    %v1694 = vmul.f32 %v1688, %v1693
    %v1695 = vmul.f32 %v1689, %v1693
    %v1696 = vlaneseq
    %v1697 = vshrl.u32 %v1696, 7
    %v1698 = vsub.s32 0, %v1697
    %v1699 = vrot.slane %v1663, %v1698
    %v1700 = vadd.f32 %v1694, %v1699
    %v1701 = vadd.f32 %v1695, %v1699
    %v1702 = vpack.c.bf16 %v1701, %v1700
    %s1703 = scalar_lea.vmem [#allocation7], 16
    %v1704 = vld [vmem:[%s1703] sm:$0xf]
    %v1705 = vld [vmem:[%s1703 + $0x4] sm:$0xf]
    %v1706 = vld [vmem:[%s1703 + $0x8] sm:$0xf]
    %v1707 = vld [vmem:[%s1703 + $0xc] sm:$0xf]
    %v1708 = vld [vmem:[#allocation10 + $0x1] sm:$0x1]
    %v1709 = vlaneseq
    %v1710 = vshrl.u32 %v1709, 7
    %v1711 = vsub.s32 0, %v1710
    %v1712 = vrot.slane %v1708, %v1711
    %v1717 = vunpack.c.l.b16 %v1704
    %v1718 = vunpack.c.l.b16 %v1705
    %v1719 = vunpack.c.l.b16 %v1706
    %v1720 = vunpack.c.l.b16 %v1707
    %v1721 = vpack.c.b16 %v1718, %v1717
    %v1722 = vpack.c.b16 %v1720, %v1719
    %v1726 = vsel %vm126, %v1702, 0
    %1728 = vmatprep.subr.bf16.mxu0 0
    %1729 = vmatpush1.bf16.msra.mxu0 %v1721
    %1730 = vmatprep.subr.bf16.mxu0 0
    %1731 = vmatpush1.bf16.msra.mxu0 %v1722
    %1732 = vmatprep.subr.bf16.mxu0 0
    %1733 = vmatpush1.bf16.msra.mxu0 0
    %1734 = vmatprep.subr.bf16.mxu0 0
    %1735 = vmatpush1.bf16.msra.mxu0 0
    %1736 = vmatprep.subr.bf16.mxu0 0
    %1737 = vmatpush1.bf16.msra.mxu0 0
    %1738 = vmatprep.subr.bf16.mxu0 0
    %1739 = vmatpush1.bf16.msra.mxu0 0
    %1740 = vmatprep.subr.bf16.mxu0 0
    %1741 = vmatpush1.bf16.msra.mxu0 0
    %1742 = vmatprep.subr.bf16.mxu0 0
    %1743 = vmatpush1.bf16.msra.mxu0 0
    %1744 = vmatprep.subr.bf16.mxu0 0
    %1745 = vmatpush1.bf16.msra.mxu0 0
    %1746 = vmatprep.subr.bf16.mxu0 0
    %1747 = vmatpush1.bf16.msra.mxu0 0
    %1748 = vmatprep.subr.bf16.mxu0 0
    %1749 = vmatpush1.bf16.msra.mxu0 0
    %1750 = vmatprep.subr.bf16.mxu0 0
    %1751 = vmatpush1.bf16.msra.mxu0 0
    %1752 = vmatprep.subr.bf16.mxu0 0
    %1753 = vmatpush1.bf16.msra.mxu0 0
    %1754 = vmatprep.subr.bf16.mxu0 0
    %1755 = vmatpush1.bf16.msra.mxu0 0
    %1756 = vmatprep.subr.bf16.mxu0 0
    %1757 = vmatpush1.bf16.msra.mxu0 0
    %1758 = vmatprep.subr.bf16.mxu0 0
    %1759 = vmatpush1.bf16.msra.mxu0 0
    %1760 = vmatprep.mubr.bf16.mxu0 0
    %1761 = vmatmul.mubr.bf16.gmra.mrb[0].mxu0 %v1726
    %v1762 = vpop.f32.mrb[0].mxu0
    %v1763 = vadd.f32 %v1712, %v1762
    %v1764 = vpop.f32.mrb[0].mxu0
    %v1765 = vpop.f32.mrb[0].mxu0
    %v1766 = vadd.f32 %v1712, %v1765
    %v1767 = vpop.f32.mrb[0].mxu0
    %1768 = vdwg.mxu0
    %v1769 = vmul.f32 %v1763, %v1763
    %v1770 = vmul.f32 %v1766, %v1766
    %v1771 = vmul.f32 %v1763, %v1769
    %v1772 = vmul.f32 %v1766, %v1770
    %v1773 = vmul.f32 %v1771, 0.044715
    %v1774 = vmul.f32 %v1772, 0.044715
    %v1775 = vadd.f32 %v1763, %v1773
    %v1776 = vadd.f32 %v1766, %v1774
    %v1777 = vmul.f32 %v1775, 0.7978846
    %v1778 = vmul.f32 %v1776, 0.7978846
    %v1779 = vtanh.pop %v1777
    %v1780 = vtanh.pop %v1778
    %v1781 = vadd.f32 %v1779, 1.0
    %v1782 = vadd.f32 %v1780, 1.0
    %v1783 = vmul.f32 %v1781, 0.5
    %v1784 = vmul.f32 %v1782, 0.5
    %v1785 = vmul.f32 %v1763, %v1783
    %v1786 = vmul.f32 %v1766, %v1784
    %v1787 = vpack.c.bf16 %v1786, %v1785
    %s1788 = scalar_lea.vmem %s5, 32
    %v1789 = vld [vmem:[%s1788] sm:$0xf]
    %v1790 = vld [vmem:[%s1788 + $0x4] sm:$0xf]
    %v1791 = vld [vmem:[%s1788 + $0x8] sm:$0xf]
    %v1792 = vld [vmem:[%s1788 + $0xc] sm:$0xf]
    %v1793 = vld [vmem:[%s1788 + $0x10] sm:$0xf]
    %v1794 = vld [vmem:[%s1788 + $0x14] sm:$0xf]
    %v1795 = vld [vmem:[%s1788 + $0x18] sm:$0xf]
    %v1796 = vld [vmem:[%s1788 + $0x1c] sm:$0xf]
    %v1797 = vld [vmem:[#allocation8 + $0x11] sm:$0x1]
    %v1798 = vlaneseq
    %v1799 = vshrl.u32 %v1798, 7
    %v1800 = vsub.s32 0, %v1799
    %v1801 = vrot.slane %v1797, %v1800
    %v1810 = vunpack.c.l.b16 %v1789
    %v1811 = vunpack.c.l.b16 %v1790
    %v1812 = vunpack.c.l.b16 %v1791
    %v1813 = vunpack.c.l.b16 %v1792
    %v1814 = vunpack.c.l.b16 %v1793
    %v1815 = vunpack.c.l.b16 %v1794
    %v1816 = vunpack.c.l.b16 %v1795
    %v1817 = vunpack.c.l.b16 %v1796
    %v1818 = vpack.c.b16 %v1811, %v1810
    %v1819 = vpack.c.b16 %v1813, %v1812
    %v1820 = vpack.c.b16 %v1815, %v1814
    %v1821 = vpack.c.b16 %v1817, %v1816
    %v1827 = vsel %vm957, %v1787, 0
    %1829 = vmatprep.subr.bf16.mxu0 0
    %1830 = vmatpush1.bf16.msra.mxu0 %v1818
    %1831 = vmatprep.subr.bf16.mxu0 0
    %1832 = vmatpush1.bf16.msra.mxu0 %v1819
    %1833 = vmatprep.subr.bf16.mxu0 0
    %1834 = vmatpush1.bf16.msra.mxu0 %v1820
    %1835 = vmatprep.subr.bf16.mxu0 0
    %1836 = vmatpush1.bf16.msra.mxu0 %v1821
    %1837 = vmatprep.subr.bf16.mxu0 0
    %1838 = vmatpush1.bf16.msra.mxu0 0
    %1839 = vmatprep.subr.bf16.mxu0 0
    %1840 = vmatpush1.bf16.msra.mxu0 0
    %1841 = vmatprep.subr.bf16.mxu0 0
    %1842 = vmatpush1.bf16.msra.mxu0 0
    %1843 = vmatprep.subr.bf16.mxu0 0
    %1844 = vmatpush1.bf16.msra.mxu0 0
    %1845 = vmatprep.subr.bf16.mxu0 0
    %1846 = vmatpush1.bf16.msra.mxu0 0
    %1847 = vmatprep.subr.bf16.mxu0 0
    %1848 = vmatpush1.bf16.msra.mxu0 0
    %1849 = vmatprep.subr.bf16.mxu0 0
    %1850 = vmatpush1.bf16.msra.mxu0 0
    %1851 = vmatprep.subr.bf16.mxu0 0
    %1852 = vmatpush1.bf16.msra.mxu0 0
    %1853 = vmatprep.subr.bf16.mxu0 0
    %1854 = vmatpush1.bf16.msra.mxu0 0
    %1855 = vmatprep.subr.bf16.mxu0 0
    %1856 = vmatpush1.bf16.msra.mxu0 0
    %1857 = vmatprep.subr.bf16.mxu0 0
    %1858 = vmatpush1.bf16.msra.mxu0 0
    %1859 = vmatprep.subr.bf16.mxu0 0
    %1860 = vmatpush1.bf16.msra.mxu0 0
    %1861 = vmatprep.mubr.bf16.mxu0 0
    %1862 = vmatmul.mubr.bf16.gmra.mrb[0].mxu0 %v1827
    %v1863 = vpop.f32.mrb[0].mxu0
    %v1864 = vadd.f32 %v1801, %v1863
    %v1865 = vpop.f32.mrb[0].mxu0
    %v1866 = vpop.f32.mrb[0].mxu0
    %v1867 = vadd.f32 %v1801, %v1866
    %v1868 = vpop.f32.mrb[0].mxu0
    %1869 = vdwg.mxu0
    %v1870 = vadd.f32 %v1700, %v1864
    %v1871 = vadd.f32 %v1701, %v1867
    %v1872 = vld [vmem:[#allocation8 + $0x12] sm:$0x1]
    %v1873 = vld [vmem:[#allocation8 + $0x13] sm:$0x1]
    %v1874 = vsel %vm126, %v1870, 0.0
    %1875 = vadd.xlane.f32.xlu0 %v1874
    %v1876 = vpop.xlane.xlu0 %1875
    %v1877 = vsel %vm126, %v1871, 0.0
    %1878 = vadd.xlane.f32.xlu0 %v1877
    %v1879 = vpop.xlane.xlu0 %1878
    %v1880 = vmul.f32 %v1876, %v133
    %v1881 = vmul.f32 %v1879, %v133
    %v1882 = vsub.f32 %v1870, %v1880
    %v1883 = vsub.f32 %v1871, %v1881
    %v1884 = vmul.f32 %v1882, %v1882
    %v1885 = vmul.f32 %v1883, %v1883
    %v1886 = vsel %vm126, %v1884, 0.0
    %1887 = vadd.xlane.f32.xlu0 %v1886
    %v1888 = vpop.xlane.xlu0 %1887
    %v1889 = vsel %vm126, %v1885, 0.0
    %1890 = vadd.xlane.f32.xlu0 %v1889
    %v1891 = vpop.xlane.xlu0 %1890
    %v1892 = vmul.f32 %v1888, %v133
    %v1893 = vmul.f32 %v1891, %v133
    %v1894 = vadd.f32 %v1892, 1e-05
    %v1895 = vadd.f32 %v1893, 1e-05
    %v1896 = vrsqrt.pop %v1894
    %v1897 = vrsqrt.pop %v1895
    %v1898 = vmul.f32 %v1882, %v1896
    %v1899 = vmul.f32 %v1883, %v1897
    %v1900 = vlaneseq
    %v1901 = vshrl.u32 %v1900, 7
    %v1902 = vsub.s32 0, %v1901
    %v1903 = vrot.slane %v1872, %v1902
    %v1904 = vmul.f32 %v1898, %v1903
    %v1905 = vmul.f32 %v1899, %v1903
    %v1906 = vlaneseq
    %v1907 = vshrl.u32 %v1906, 7
    %v1908 = vsub.s32 0, %v1907
    %v1909 = vrot.slane %v1873, %v1908
    %v1910 = vadd.f32 %v1904, %v1909
    %v1911 = vadd.f32 %v1905, %v1909
    %v1913 = vrot.slane %v1910, 7
    %v1916 = vrot.slane %v1911, 6
    %vm1918 = vcmask 1040384
    %v1919 = vsel %vm1918, %v1913, %v1916
    %v1920 = vld [vmem:[%s8] sm:$0xff]
    %v1921 = vld [vmem:[%s8 + $0x8] sm:$0xff]
    %v1922 = vld [vmem:[%s8 + $0x10] sm:$0xff]
    %v1923 = vld [vmem:[%s8 + $0x18] sm:$0xff]
    %v1924 = vld [vmem:[#allocation11] sm:$0x1]
    %v1926 = vlaneseq
    %v1927 = vshrl.u32 %v1926, 7
    %v1928 = vsub.s32 0, %v1927
    %v1929 = vrot.slane %v1924, %v1928
    %v1932 = vsel %vm126, %v1919, 0
    %1934 = vmatprep.subr.mxu0 0.0
    %1935 = vmatpush1.msra.mxu0 %v1920
    %1936 = vmatprep.subr.mxu0 0.0
    %1937 = vmatpush1.msra.mxu0 %v1921
    %1938 = vmatprep.subr.mxu0 0.0
    %1939 = vmatpush1.msra.mxu0 %v1922
    %1940 = vmatprep.subr.mxu0 0.0
    %1941 = vmatpush1.msra.mxu0 %v1923
    %1942 = vmatprep.subr.mxu0 0.0
    %1943 = vmatpush1.msra.mxu0 0.0
    %1944 = vmatprep.subr.mxu0 0.0
    %1945 = vmatpush1.msra.mxu0 0.0
    %1946 = vmatprep.subr.mxu0 0.0
    %1947 = vmatpush1.msra.mxu0 0.0
    %1948 = vmatprep.subr.mxu0 0.0
    %1949 = vmatpush1.msra.mxu0 0.0
    %1950 = vmatprep.subr.mxu0 0.0
    %1951 = vmatpush1.msra.mxu0 0.0
    %1952 = vmatprep.subr.mxu0 0.0
    %1953 = vmatpush1.msra.mxu0 0.0
    %1954 = vmatprep.subr.mxu0 0.0
    %1955 = vmatpush1.msra.mxu0 0.0
    %1956 = vmatprep.subr.mxu0 0.0
    %1957 = vmatpush1.msra.mxu0 0.0
    %1958 = vmatprep.subr.mxu0 0.0
    %1959 = vmatpush1.msra.mxu0 0.0
    %1960 = vmatprep.subr.mxu0 0.0
    %1961 = vmatpush1.msra.mxu0 0.0
    %1962 = vmatprep.subr.mxu0 0.0
    %1963 = vmatpush1.msra.mxu0 0.0
    %1964 = vmatprep.subr.mxu0 0.0
    %1965 = vmatpush1.msra.mxu0 0.0
    %1966 = vmatprep.subr.mxu0 0.0
    %1967 = vmatpush1.msra.mxu0 0.0
    %1968 = vmatprep.subr.mxu0 0.0
    %1969 = vmatpush1.msra.mxu0 0.0
    %1970 = vmatprep.subr.mxu0 0.0
    %1971 = vmatpush1.msra.mxu0 0.0
    %1972 = vmatprep.subr.mxu0 0.0
    %1973 = vmatpush1.msra.mxu0 0.0
    %1974 = vmatprep.subr.mxu0 0.0
    %1975 = vmatpush1.msra.mxu0 0.0
    %1976 = vmatprep.subr.mxu0 0.0
    %1977 = vmatpush1.msra.mxu0 0.0
    %1978 = vmatprep.subr.mxu0 0.0
    %1979 = vmatpush1.msra.mxu0 0.0
    %1980 = vmatprep.subr.mxu0 0.0
    %1981 = vmatpush1.msra.mxu0 0.0
    %1982 = vmatprep.subr.mxu0 0.0
    %1983 = vmatpush1.msra.mxu0 0.0
    %1984 = vmatprep.subr.mxu0 0.0
    %1985 = vmatpush1.msra.mxu0 0.0
    %1986 = vmatprep.subr.mxu0 0.0
    %1987 = vmatpush1.msra.mxu0 0.0
    %1988 = vmatprep.subr.mxu0 0.0
    %1989 = vmatpush1.msra.mxu0 0.0
    %1990 = vmatprep.subr.mxu0 0.0
    %1991 = vmatpush1.msra.mxu0 0.0
    %1992 = vmatprep.subr.mxu0 0.0
    %1993 = vmatpush1.msra.mxu0 0.0
    %1994 = vmatprep.subr.mxu0 0.0
    %1995 = vmatpush1.msra.mxu0 0.0
    %1996 = vmatprep.subr.mxu0 0.0
    %1997 = vmatpush1.msra.mxu0 0.0
    %1998 = vmatprep.mubr.f32.mxu0 0.0
    %1999 = vmatmul.mubr.f32.gmra.mrb[0].mxu0 %v1932
    %v2000 = vpop.f32.mrb[0].mxu0
    %v2001 = vadd.f32 %v1929, %v2000
    %v2002 = vpop.f32.mrb[0].mxu0
    %2003 = vdwg.mxu0
    %vm2004 = vcmask 74752
    %v2005 = vsel %vm2004, %v2001, -inf
    %2006 = vmax.xlane.f32.xlu0 %v2005
    %v2007 = vpop.xlane.xlu0 %2006
    %v2008 = vsub.f32 %v2001, %v2007
    %v2009 = vmul.f32 %v2008, 1.442695
    %v2010 = vpow.pop %v2009
    %v2011 = vsel %vm2004, %v2010, 0.0
    %2012 = vadd.xlane.f32.xlu0 %v2011
    %v2013 = vpop.xlane.xlu0 %2012
    %v2014 = vrcp.pop %v2013
    %v2015 = vmul.f32 %v2010, %v2014
    %v2016 = vld [vmem:[%s10] sm:$0xff]
    %v2017 = vld [vmem:[%s10 + $0x8] sm:$0x3]
    %vm2018 = vcmask 80896
    %v2020 = vsel %vm2018, %v2015, 0
    %vm2022 = vcmask 1041408
    %v2024 = vsel %vm2022, %v2017, 0
    %2026 = vmatprep.subr.mxu0 0.0
    %2027 = vmatpush1.msra.mxu0 %v2016
    %2028 = vmatprep.subr.mxu0 0.0
    %2029 = vmatpush1.msra.mxu0 %v2024
    %2030 = vmatprep.subr.mxu0 0.0
    %2031 = vmatpush1.msra.mxu0 0.0
    %2032 = vmatprep.subr.mxu0 0.0
    %2033 = vmatpush1.msra.mxu0 0.0
    %2034 = vmatprep.subr.mxu0 0.0
    %2035 = vmatpush1.msra.mxu0 0.0
    %2036 = vmatprep.subr.mxu0 0.0
    %2037 = vmatpush1.msra.mxu0 0.0
    %2038 = vmatprep.subr.mxu0 0.0
    %2039 = vmatpush1.msra.mxu0 0.0
    %2040 = vmatprep.subr.mxu0 0.0
    %2041 = vmatpush1.msra.mxu0 0.0
    %2042 = vmatprep.subr.mxu0 0.0
    %2043 = vmatpush1.msra.mxu0 0.0
    %2044 = vmatprep.subr.mxu0 0.0
    %2045 = vmatpush1.msra.mxu0 0.0
    %2046 = vmatprep.subr.mxu0 0.0
    %2047 = vmatpush1.msra.mxu0 0.0
    %2048 = vmatprep.subr.mxu0 0.0
    %2049 = vmatpush1.msra.mxu0 0.0
    %2050 = vmatprep.subr.mxu0 0.0
    %2051 = vmatpush1.msra.mxu0 0.0
    %2052 = vmatprep.subr.mxu0 0.0
    %2053 = vmatpush1.msra.mxu0 0.0
    %2054 = vmatprep.subr.mxu0 0.0
    %2055 = vmatpush1.msra.mxu0 0.0
    %2056 = vmatprep.subr.mxu0 0.0
    %2057 = vmatpush1.msra.mxu0 0.0
    %2058 = vmatprep.subr.mxu0 0.0
    %2059 = vmatpush1.msra.mxu0 0.0
    %2060 = vmatprep.subr.mxu0 0.0
    %2061 = vmatpush1.msra.mxu0 0.0
    %2062 = vmatprep.subr.mxu0 0.0
    %2063 = vmatpush1.msra.mxu0 0.0
    %2064 = vmatprep.subr.mxu0 0.0
    %2065 = vmatpush1.msra.mxu0 0.0
    %2066 = vmatprep.subr.mxu0 0.0
    %2067 = vmatpush1.msra.mxu0 0.0
    %2068 = vmatprep.subr.mxu0 0.0
    %2069 = vmatpush1.msra.mxu0 0.0
    %2070 = vmatprep.subr.mxu0 0.0
    %2071 = vmatpush1.msra.mxu0 0.0
    %2072 = vmatprep.subr.mxu0 0.0
    %2073 = vmatpush1.msra.mxu0 0.0
    %2074 = vmatprep.subr.mxu0 0.0
    %2075 = vmatpush1.msra.mxu0 0.0
    %2076 = vmatprep.subr.mxu0 0.0
    %2077 = vmatpush1.msra.mxu0 0.0
    %2078 = vmatprep.subr.mxu0 0.0
    %2079 = vmatpush1.msra.mxu0 0.0
    %2080 = vmatprep.subr.mxu0 0.0
    %2081 = vmatpush1.msra.mxu0 0.0
    %2082 = vmatprep.subr.mxu0 0.0
    %2083 = vmatpush1.msra.mxu0 0.0
    %2084 = vmatprep.subr.mxu0 0.0
    %2085 = vmatpush1.msra.mxu0 0.0
    %2086 = vmatprep.subr.mxu0 0.0
    %2087 = vmatpush1.msra.mxu0 0.0
    %2088 = vmatprep.subr.mxu0 0.0
    %2089 = vmatpush1.msra.mxu0 0.0
    %2090 = vmatprep.mubr.f32.mxu0 0.0
    %2091 = vmatmul.mubr.f32.gmra.mrb[0].mxu0 %v2020
    %v2092 = vpop.f32.mrb[0].mxu0
    %v2093 = vadd.f32 0.0, %v2092
    %v2094 = vpop.f32.mrb[0].mxu0
    %2095 = vdwg.mxu0
    %2096 = vst.msk [vmem:[#allocation13] sm:$0xff] %vm126, %v1910
    %2097 = vst.msk [vmem:[#allocation13 + $0x8] sm:$0xff] %vm126, %v1911
    %vm2098 = vcmask 253952
    %2099 = vst.msk [vmem:[#allocation13 + $0x7] sm:$0x1] %vm2098, %v2093
    %vm2100 = vcmask 254977
    %2101 = vst.msk [vmem:[#allocation13 + $0xe] sm:$0x2] %vm2100, %v2093
    // Predicated region
    $region70: #{tpu_custom_call.1} parent=1 // pred_check
      _
    $region71: #{tpu_custom_call.1} parent=1 // pred_check_branch
      %2103 = sbr.rel (0) target = $region73
    $region72: #{tpu_custom_call.1} parent=1 // pred_region
      %s2105 = ssub.s32 256, 256
      %2106 = vsyncadd [#allocation4], %s2105
      %s2107 = sshll.u32 [#allocation13], 4
      %s2108 = int_to_ptr.vmem [resolvable:$true] %s2107
      %2113 = dma.vmem_to_hbm [thread:$0]  %s2108, 256, %s11, [#allocation4], 128, 128, 8
    $region73: #{tpu_custom_call.1} parent=1 // pred_fallthru
      _
    // Predicated region
    $region74: #{tpu_custom_call.1} parent=1 // pred_check
      _
    $region75: #{tpu_custom_call.1} parent=1 // pred_check_branch
      %2115 = sbr.rel (0) target = $region77
    $region76: #{tpu_custom_call.1} parent=1 // pred_region
      %2116 = dma.done [#allocation4], 256
    $region77: #{tpu_custom_call.1} parent=1 // pred_fallthru
      _
    %2117 = vsyncpa [#allocation3], 1
    %2118 = vsyncpa [#allocation6], 1
    %2119 = vsyncpa [#allocation9], 1
    %2120 = vsyncpa [#allocation12], 1
    %2121 = vsyncpa [#allocation4], 1

</llo_original>
